<compile_context>
chip_gen: v6e
topology: v6e:2x2x1
jax: 0.10.0
libtpu: 0.0.40
codegen_flags: <defaults>
</compile_context>

<pallas_src>
import functools

import jax
import jax.numpy as jnp
from jax.experimental import pallas as pl
from jax.experimental.pallas import tpu as pltpu


def _round_up(x, m):
    return ((x + m - 1) // m) * m


# ----------------------------------------------------------------------------
# Pallas kernel: tiled matmul + bias + optional LeakyReLU (f32 accumulation)
# ----------------------------------------------------------------------------
def _matmul_bias_act_kernel(a_ref, w_ref, b_ref, o_ref, acc_ref, *, leaky_slope):
    k = pl.program_id(2)

    @pl.when(k == 0)
    def _():
        acc_ref[...] = jnp.zeros_like(acc_ref)

    acc_ref[...] += jnp.dot(a_ref[...], w_ref[...],
                            preferred_element_type=jnp.float32)

    @pl.when(k == pl.num_programs(2) - 1)
    def _():
        # Finalize in f32 (v5e has no bf16 VPU path); cast only at the store.
        acc = acc_ref[...] + b_ref[...]
        if leaky_slope is not None:
            acc = jnp.where(acc >= 0, acc, leaky_slope * acc)
        o_ref[...] = acc.astype(o_ref.dtype)


def _choose_tiles(M, K, N):
    """Pick (M_pad, K_pad, N_pad, tm, tk, tn) — big tiles, megacore-aware."""
    # Lane / N dimension: 256-wide when possible to fill the 2x256^2 MXU.
    N_pad = _round_up(N, 128)
    tn = 256 if N_pad >= 256 else 128
    N_pad = _round_up(N_pad, tn)

    # Reduction / K dimension: single step up to 2048, else 1024/2048 tiles.
    K_pad = _round_up(K, 128)
    if K_pad <= 2048:
        tk = K_pad
    else:
        tk = 2048 if K_pad % 2048 == 0 else 1024
        K_pad = _round_up(K_pad, tk)

    # Sublane / M dimension (multiples of 16 for bf16 sublane packing).
    M_pad = _round_up(M, 16)
    max_tm = 512
    n_grid = N_pad // tn
    if M_pad <= max_tm:
        if n_grid == 1 and M_pad >= 32:
            # Single N tile: split M so the parallel grid has >=2 tiles and
            # both v7x TensorCores get work.
            tm = _round_up(M_pad // 2, 16)
            M_pad = _round_up(M_pad, tm)
        else:
            tm = M_pad
    else:
        tm = max_tm
        M_pad = _round_up(M_pad, tm)
    return M_pad, K_pad, N_pad, tm, tk, tn


def _pallas_matmul(a, w, b, leaky_slope, out_dtype):
    """out = leaky(a @ w + b). a:(M,K), w:(K,N), b:(N,) -> (M,N) out_dtype."""
    M, K = a.shape
    K2, N = w.shape
    assert K == K2

    M_pad, K_pad, N_pad, tm, tk, tn = _choose_tiles(M, K, N)

    # ---- operands: bf16 on the MXU; elide the zero-pad copy when aligned ----
    a_bf = a.astype(jnp.bfloat16)
    if (M_pad, K_pad) == (M, K):
        a_p = a_bf
    else:
        a_p = jnp.zeros((M_pad, K_pad), jnp.bfloat16).at[:M, :K].set(a_bf)

    w_bf = w.astype(jnp.bfloat16)
    if (K_pad, N_pad) == (K, N):
        w_p = w_bf
    else:
        # K padding stays zero-filled -> reduction never reads garbage.
        w_p = jnp.zeros((K_pad, N_pad), jnp.bfloat16).at[:K, :N].set(w_bf)

    b_f = b.astype(jnp.float32).reshape(1, N)
    if N_pad == N:
        b_p = b_f
    else:
        b_p = jnp.zeros((1, N_pad), jnp.float32).at[:, :N].set(b_f)

    grid = (M_pad // tm, N_pad // tn, K_pad // tk)
    kernel = functools.partial(_matmul_bias_act_kernel, leaky_slope=leaky_slope)

    out_itemsize = jnp.dtype(out_dtype).itemsize
    flops = 2 * M_pad * K_pad * N_pad
    bytes_accessed = ((M_pad * K_pad + K_pad * N_pad) * 2
                      + N_pad * 4 + M_pad * N_pad * out_itemsize)

    # Double-buffered VMEM footprint (inputs bf16, output out_dtype, f32 acc).
    vmem_bytes = (2 * (tm * tk + tk * tn) * 2
                  + 2 * tm * tn * out_itemsize
                  + tm * tn * 4
                  + 2 * tn * 4)
    vmem_limit = int(min(max(2 * vmem_bytes, 16 * 1024 * 1024),
                         48 * 1024 * 1024))

    out = pl.pallas_call(
        kernel,
        out_shape=jax.ShapeDtypeStruct((M_pad, N_pad), out_dtype),
        grid_spec=pltpu.PrefetchScalarGridSpec(
            num_scalar_prefetch=0,
            grid=grid,
            in_specs=[
                pl.BlockSpec((tm, tk), lambda i, j, k: (i, k)),
                pl.BlockSpec((tk, tn), lambda i, j, k: (k, j)),
                pl.BlockSpec((1, tn), lambda i, j, k: (0, j)),
            ],
            out_specs=pl.BlockSpec((tm, tn), lambda i, j, k: (i, j)),
            scratch_shapes=[pltpu.VMEM((tm, tn), jnp.float32)],
        ),
        compiler_params=pltpu.CompilerParams(
            dimension_semantics=("parallel", "parallel", "arbitrary"),
            allow_input_fusion=[True, False, False],
            vmem_limit_bytes=vmem_limit,
        ),
        cost_estimate=pl.CostEstimate(
            flops=flops, transcendentals=0, bytes_accessed=bytes_accessed),
    )(a_p, w_p, b_p)
    return out[:M, :N]


# ----------------------------------------------------------------------------
# Conv2d = im2col (JAX glue) + Pallas matmul kernel (or XLA dot for tiny N)
# ----------------------------------------------------------------------------
def _extract_patches(x, kh, kw, stride, pad):
    # x: (B, H, W, C) -> (B, OH, OW, KH*KW*C)   [patch order: (kh, kw, c)]
    if pad:
        x = jnp.pad(x, ((0, 0), (pad, pad), (pad, pad), (0, 0)))
    B, Hp, Wp, C = x.shape
    OH = (Hp - kh) // stride + 1
    OW = (Wp - kw) // stride + 1
    cols = []
    for i in range(kh):
        for j in range(kw):
            cols.append(x[:, i:i + stride * OH:stride, j:j + stride * OW:stride, :])
    p = jnp.stack(cols, axis=3)  # (B, OH, OW, KH*KW, C)
    return p.reshape(B, OH, OW, kh * kw * C), OH, OW


def conv2d(x_nhwc, w_oihw, bias, stride, pad, leaky_slope=None, *,
           out_dtype=jnp.float32, use_pallas=True):
    """Conv2d with PyTorch OIHW weights on an NHWC activation tensor."""
    OC, IC, KH, KW = w_oihw.shape
    assert x_nhwc.shape[-1] == IC
    patches, OH, OW = _extract_patches(x_nhwc, KH, KW, stride, pad)
    B = x_nhwc.shape[0]
    a = patches.reshape(B * OH * OW, KH * KW * IC)
    # OIHW -> (KH, KW, IC, OC) -> (KH*KW*IC, OC), matching the patch ordering.
    w = jnp.transpose(w_oihw, (2, 3, 1, 0)).reshape(KH * KW * IC, OC)
    b = bias if bias is not None else jnp.zeros((OC,), jnp.float32)

    if use_pallas:
        out = _pallas_matmul(a, w, b, leaky_slope, out_dtype)
    else:
        # Tiny-N heads: a lane-padded Pallas dispatch would waste >95% of MXU
        # columns / stores; per the perf review, use a plain XLA matmul.
        out = jnp.dot(a.astype(jnp.float32), w.astype(jnp.float32),
                      preferred_element_type=jnp.float32) + b[None, :]
        if leaky_slope is not None:
            out = jnp.where(out >= 0, out, leaky_slope * out)
        out = out.astype(out_dtype)
    return out.reshape(B, OH, OW, OC)


# ----------------------------------------------------------------------------
# Discriminator: parameters + forward
# ----------------------------------------------------------------------------
def init_params(key, image_size=16, conv_dim=8, c_dim=5, repeat_num=3):
    params = {"main": []}
    keys = jax.random.split(key, repeat_num + 2)

    def winit(k, shape):
        fan_in = shape[1] * shape[2] * shape[3]
        return (jax.random.normal(k, shape, jnp.float32) *
                (2.0 / fan_in) ** 0.5).astype(jnp.float32)

    in_c, curr = 3, conv_dim
    for layer in range(repeat_num):
        out_c = curr if layer == 0 else in_c * 2
        w = winit(keys[layer], (out_c, in_c, 4, 4))
        b = jnp.zeros((out_c,), jnp.float32)
        params["main"].append((w, b))
        in_c = out_c
    curr_dim = in_c
    ksize = image_size // (2 ** repeat_num)
    params["conv1_w"] = winit(keys[repeat_num], (1, curr_dim, 3, 3))
    params["conv2_w"] = winit(keys[repeat_num + 1], (c_dim, curr_dim, ksize, ksize))
    return params


def discriminator_forward(params, x_nchw):
    # NCHW (PyTorch) -> NHWC (kernel layout); bf16 operands, f32 accumulation.
    x = jnp.transpose(x_nchw, (0, 2, 3, 1)).astype(jnp.bfloat16)
    for (w, b) in params["main"]:
        # Intermediate layers store bf16 (next layer consumes bf16 anyway).
        x = conv2d(x, w, b, stride=2, pad=1, leaky_slope=0.01,
                   out_dtype=jnp.bfloat16, use_pallas=True)
    h = x
    # Tiny-N heads (N=1 and N=c_dim): plain XLA matmul per the perf review.
    out_src = conv2d(h, params["conv1_w"], None, stride=1, pad=1,
                     out_dtype=jnp.float32, use_pallas=False)
    out_cls = conv2d(h, params["conv2_w"], None, stride=1, pad=0,
                     out_dtype=jnp.float32, use_pallas=False)
    out_src = jnp.transpose(out_src, (0, 3, 1, 2))      # back to NCHW
    out_cls = out_cls.reshape(out_cls.shape[0], -1)      # (B, c_dim)
    return out_src, out_cls


if __name__ == "__main__":
    # Small-shape configuration consistent with the module's structure.
    image_size, conv_dim, c_dim, repeat_num, batch = 16, 8, 5, 3, 2

    key = jax.random.PRNGKey(0)
    kp, kx = jax.random.split(key)
    params = init_params(kp, image_size, conv_dim, c_dim, repeat_num)
    x = jax.random.normal(kx, (batch, 3, image_size, image_size), jnp.float32)

    fwd = jax.jit(discriminator_forward)
    out_src, out_cls = fwd(params, x)
    jax.block_until_ready((out_src, out_cls))

    final_sp = image_size // (2 ** repeat_num)
    assert out_src.shape == (batch, 1, final_sp, final_sp), out_src.shape
    assert out_cls.shape == (batch, c_dim), out_cls.shape
    assert bool(jnp.all(jnp.isfinite(out_src))) and bool(jnp.all(jnp.isfinite(out_cls)))
    print("KERNEL_OK")
</pallas_src>

<mosaic_0001>
module attributes {stable_mosaic.version = 11 : i64} {
  func.func @_matmul_bias_act_kernel(%arg0: i32, %arg1: i32, %arg2: i32, %arg3: memref<64x128xbf16, #tpu.memory_space<vmem>>, %arg4: memref<128x128xbf16, #tpu.memory_space<vmem>>, %arg5: memref<1x128xf32, #tpu.memory_space<vmem>>, %arg6: memref<64x128xbf16, #tpu.memory_space<vmem>>, %arg7: memref<64x128xf32, #tpu.memory_space<vmem>>) attributes {dimension_semantics = [#tpu.dimension_semantics<parallel>, #tpu.dimension_semantics<parallel>, #tpu.dimension_semantics<arbitrary>], iteration_bounds = array<i64: 2, 1, 1>, scalar_prefetch = 0 : i64, scratch_operands = 1 : i64, tpu.core_type = #tpu.core_type<tc>, window_params = [{transform_indices = @transform_0, window_bounds = array<i64: 64, 128>}, {transform_indices = @transform_1, window_bounds = array<i64: 128, 128>}, {transform_indices = @transform_2, window_bounds = array<i64: 1, 128>}, {transform_indices = @transform_3, window_bounds = array<i64: 64, 128>}]} {
    %c0_i32 = arith.constant 0 : i32
    %0 = arith.cmpi eq, %arg2, %c0_i32 : i32
    %1 = arith.extui %0 : i1 to i32
    %c0_i32_0 = arith.constant 0 : i32
    %2 = arith.cmpi ne, %1, %c0_i32_0 : i32
    scf.if %2 {
      %cst_10 = arith.constant 0.000000e+00 : f32
      %12 = vector.broadcast %cst_10 : f32 to vector<64x128xf32>
      %c0_11 = arith.constant 0 : index
      %c0_12 = arith.constant 0 : index
      %13 = vector.load %arg7[%c0_11, %c0_12] : memref<64x128xf32, #tpu.memory_space<vmem>>, vector<64x128xf32>
      tpu.vector_store %arg7[%c0_11, %c0_12], %12 {strides = array<i32>} : memref<64x128xf32, #tpu.memory_space<vmem>>, vector<64x128xf32>,
    } else {
    }
    %c0 = arith.constant 0 : index
    %c0_1 = arith.constant 0 : index
    %3 = vector.load %arg7[%c0, %c0_1] : memref<64x128xf32, #tpu.memory_space<vmem>>, vector<64x128xf32>
    %c0_2 = arith.constant 0 : index
    %c0_3 = arith.constant 0 : index
    %4 = vector.load %arg3[%c0_2, %c0_3] : memref<64x128xbf16, #tpu.memory_space<vmem>>, vector<64x128xbf16>
    %c0_4 = arith.constant 0 : index
    %c0_5 = arith.constant 0 : index
    %5 = vector.load %arg4[%c0_4, %c0_5] : memref<128x128xbf16, #tpu.memory_space<vmem>>, vector<128x128xbf16>
    %cst = arith.constant dense<0.000000e+00> : vector<64x128xf32>
    %6 = tpu.matmul %4, %5, %cst {dimension_numbers = #tpu.dot_dimension_numbers<[1], [0], [0], [1], [0, 0, 1, 1], [], []>} : vector<64x128xbf16>, vector<128x128xbf16>, vector<64x128xf32> -> vector<64x128xf32>
    %7 = arith.addf %3, %6 : vector<64x128xf32>
    %c0_6 = arith.constant 0 : index
    %c0_7 = arith.constant 0 : index
    %8 = vector.load %arg7[%c0_6, %c0_7] : memref<64x128xf32, #tpu.memory_space<vmem>>, vector<64x128xf32>
    tpu.vector_store %arg7[%c0_6, %c0_7], %7 {strides = array<i32>} : memref<64x128xf32, #tpu.memory_space<vmem>>, vector<64x128xf32>,
    %c0_i32_8 = arith.constant 0 : i32
    %9 = arith.cmpi eq, %arg2, %c0_i32_8 : i32
    %10 = arith.extui %9 : i1 to i32
    %c0_i32_9 = arith.constant 0 : i32
    %11 = arith.cmpi ne, %10, %c0_i32_9 : i32
    scf.if %11 {
      %c0_10 = arith.constant 0 : index
      %c0_11 = arith.constant 0 : index
      %12 = vector.load %arg7[%c0_10, %c0_11] : memref<64x128xf32, #tpu.memory_space<vmem>>, vector<64x128xf32>
      %c0_12 = arith.constant 0 : index
      %c0_13 = arith.constant 0 : index
      %13 = vector.load %arg5[%c0_12, %c0_13] : memref<1x128xf32, #tpu.memory_space<vmem>>, vector<1x128xf32>
      %14 = vector.broadcast %13 : vector<1x128xf32> to vector<64x128xf32>
      %15 = arith.addf %12, %14 : vector<64x128xf32>
      %cst_14 = arith.constant 0.000000e+00 : f32
      %16 = vector.broadcast %cst_14 : f32 to vector<64x128xf32>
      %17 = arith.cmpf oge, %15, %16 : vector<64x128xf32>
      %cst_15 = arith.constant 0.00999999977 : f32
      %18 = vector.broadcast %cst_15 : f32 to vector<64x128xf32>
      %19 = arith.mulf %18, %15 : vector<64x128xf32>
      %20 = arith.select %17, %15, %19 : vector<64x128xi1>, vector<64x128xf32>
      %21 = arith.truncf %20 : vector<64x128xf32> to vector<64x128xbf16>
      %c0_16 = arith.constant 0 : index
      %c0_17 = arith.constant 0 : index
      %22 = vector.load %arg6[%c0_16, %c0_17] : memref<64x128xbf16, #tpu.memory_space<vmem>>, vector<64x128xbf16>
      tpu.vector_store %arg6[%c0_16, %c0_17], %21 {strides = array<i32>} : memref<64x128xbf16, #tpu.memory_space<vmem>>, vector<64x128xbf16>,
    } else {
    }
    return
  }
  func.func @transform_0(%arg0: i32, %arg1: i32, %arg2: i32) -> (i32, i32) {
    %c0_i32 = arith.constant 0 : i32
    return %arg0, %arg2 : i32, i32
  }
  func.func @transform_1(%arg0: i32, %arg1: i32, %arg2: i32) -> (i32, i32) {
    %c0_i32 = arith.constant 0 : i32
    return %arg2, %arg1 : i32, i32
  }
  func.func @transform_2(%arg0: i32, %arg1: i32, %arg2: i32) -> (i32, i32) {
    %c0_i32 = arith.constant 0 : i32
    %c0_i32_0 = arith.constant 0 : i32
    return %c0_i32, %arg1 : i32, i32
  }
  func.func @transform_3(%arg0: i32, %arg1: i32, %arg2: i32) -> (i32, i32) {
    %c0_i32 = arith.constant 0 : i32
    return %arg0, %arg1 : i32, i32
  }
}

module attributes {stable_mosaic.version = 11 : i64} {
  func.func @_matmul_bias_act_kernel(%arg0: i32, %arg1: i32, %arg2: i32, %arg3: memref<16x128xbf16, #tpu.memory_space<vmem>>, %arg4: memref<128x128xbf16, #tpu.memory_space<vmem>>, %arg5: memref<1x128xf32, #tpu.memory_space<vmem>>, %arg6: memref<16x128xbf16, #tpu.memory_space<vmem>>, %arg7: memref<16x128xf32, #tpu.memory_space<vmem>>) attributes {dimension_semantics = [#tpu.dimension_semantics<parallel>, #tpu.dimension_semantics<parallel>, #tpu.dimension_semantics<arbitrary>], iteration_bounds = array<i64: 2, 1, 1>, scalar_prefetch = 0 : i64, scratch_operands = 1 : i64, tpu.core_type = #tpu.core_type<tc>, window_params = [{transform_indices = @transform_0, window_bounds = array<i64: 16, 128>}, {transform_indices = @transform_1, window_bounds = array<i64: 128, 128>}, {transform_indices = @transform_2, window_bounds = array<i64: 1, 128>}, {transform_indices = @transform_3, window_bounds = array<i64: 16, 128>}]} {
    %c0_i32 = arith.constant 0 : i32
    %0 = arith.cmpi eq, %arg2, %c0_i32 : i32
    %1 = arith.extui %0 : i1 to i32
    %c0_i32_0 = arith.constant 0 : i32
    %2 = arith.cmpi ne, %1, %c0_i32_0 : i32
    scf.if %2 {
      %cst_10 = arith.constant 0.000000e+00 : f32
      %12 = vector.broadcast %cst_10 : f32 to vector<16x128xf32>
      %c0_11 = arith.constant 0 : index
      %c0_12 = arith.constant 0 : index
      %13 = vector.load %arg7[%c0_11, %c0_12] : memref<16x128xf32, #tpu.memory_space<vmem>>, vector<16x128xf32>
      tpu.vector_store %arg7[%c0_11, %c0_12], %12 {strides = array<i32>} : memref<16x128xf32, #tpu.memory_space<vmem>>, vector<16x128xf32>,
    } else {
    }
    %c0 = arith.constant 0 : index
    %c0_1 = arith.constant 0 : index
    %3 = vector.load %arg7[%c0, %c0_1] : memref<16x128xf32, #tpu.memory_space<vmem>>, vector<16x128xf32>
    %c0_2 = arith.constant 0 : index
    %c0_3 = arith.constant 0 : index
    %4 = vector.load %arg3[%c0_2, %c0_3] : memref<16x128xbf16, #tpu.memory_space<vmem>>, vector<16x128xbf16>
    %c0_4 = arith.constant 0 : index
    %c0_5 = arith.constant 0 : index
    %5 = vector.load %arg4[%c0_4, %c0_5] : memref<128x128xbf16, #tpu.memory_space<vmem>>, vector<128x128xbf16>
    %cst = arith.constant dense<0.000000e+00> : vector<16x128xf32>
    %6 = tpu.matmul %4, %5, %cst {dimension_numbers = #tpu.dot_dimension_numbers<[1], [0], [0], [1], [0, 0, 1, 1], [], []>} : vector<16x128xbf16>, vector<128x128xbf16>, vector<16x128xf32> -> vector<16x128xf32>
    %7 = arith.addf %3, %6 : vector<16x128xf32>
    %c0_6 = arith.constant 0 : index
    %c0_7 = arith.constant 0 : index
    %8 = vector.load %arg7[%c0_6, %c0_7] : memref<16x128xf32, #tpu.memory_space<vmem>>, vector<16x128xf32>
    tpu.vector_store %arg7[%c0_6, %c0_7], %7 {strides = array<i32>} : memref<16x128xf32, #tpu.memory_space<vmem>>, vector<16x128xf32>,
    %c0_i32_8 = arith.constant 0 : i32
    %9 = arith.cmpi eq, %arg2, %c0_i32_8 : i32
    %10 = arith.extui %9 : i1 to i32
    %c0_i32_9 = arith.constant 0 : i32
    %11 = arith.cmpi ne, %10, %c0_i32_9 : i32
    scf.if %11 {
      %c0_10 = arith.constant 0 : index
      %c0_11 = arith.constant 0 : index
      %12 = vector.load %arg7[%c0_10, %c0_11] : memref<16x128xf32, #tpu.memory_space<vmem>>, vector<16x128xf32>
      %c0_12 = arith.constant 0 : index
      %c0_13 = arith.constant 0 : index
      %13 = vector.load %arg5[%c0_12, %c0_13] : memref<1x128xf32, #tpu.memory_space<vmem>>, vector<1x128xf32>
      %14 = vector.broadcast %13 : vector<1x128xf32> to vector<16x128xf32>
      %15 = arith.addf %12, %14 : vector<16x128xf32>
      %cst_14 = arith.constant 0.000000e+00 : f32
      %16 = vector.broadcast %cst_14 : f32 to vector<16x128xf32>
      %17 = arith.cmpf oge, %15, %16 : vector<16x128xf32>
      %cst_15 = arith.constant 0.00999999977 : f32
      %18 = vector.broadcast %cst_15 : f32 to vector<16x128xf32>
      %19 = arith.mulf %18, %15 : vector<16x128xf32>
      %20 = arith.select %17, %15, %19 : vector<16x128xi1>, vector<16x128xf32>
      %21 = arith.truncf %20 : vector<16x128xf32> to vector<16x128xbf16>
      %c0_16 = arith.constant 0 : index
      %c0_17 = arith.constant 0 : index
      %22 = vector.load %arg6[%c0_16, %c0_17] : memref<16x128xbf16, #tpu.memory_space<vmem>>, vector<16x128xbf16>
      tpu.vector_store %arg6[%c0_16, %c0_17], %21 {strides = array<i32>} : memref<16x128xbf16, #tpu.memory_space<vmem>>, vector<16x128xbf16>,
    } else {
    }
    return
  }
  func.func @transform_0(%arg0: i32, %arg1: i32, %arg2: i32) -> (i32, i32) {
    %c0_i32 = arith.constant 0 : i32
    return %arg0, %arg2 : i32, i32
  }
  func.func @transform_1(%arg0: i32, %arg1: i32, %arg2: i32) -> (i32, i32) {
    %c0_i32 = arith.constant 0 : i32
    return %arg2, %arg1 : i32, i32
  }
  func.func @transform_2(%arg0: i32, %arg1: i32, %arg2: i32) -> (i32, i32) {
    %c0_i32 = arith.constant 0 : i32
    %c0_i32_0 = arith.constant 0 : i32
    return %c0_i32, %arg1 : i32, i32
  }
  func.func @transform_3(%arg0: i32, %arg1: i32, %arg2: i32) -> (i32, i32) {
    %c0_i32 = arith.constant 0 : i32
    return %arg0, %arg1 : i32, i32
  }
}

module attributes {stable_mosaic.version = 11 : i64} {
  func.func @_matmul_bias_act_kernel(%arg0: i32, %arg1: i32, %arg2: i32, %arg3: memref<16x256xbf16, #tpu.memory_space<vmem>>, %arg4: memref<256x128xbf16, #tpu.memory_space<vmem>>, %arg5: memref<1x128xf32, #tpu.memory_space<vmem>>, %arg6: memref<16x128xbf16, #tpu.memory_space<vmem>>, %arg7: memref<16x128xf32, #tpu.memory_space<vmem>>) attributes {dimension_semantics = [#tpu.dimension_semantics<parallel>, #tpu.dimension_semantics<parallel>, #tpu.dimension_semantics<arbitrary>], iteration_bounds = array<i64: 1, 1, 1>, scalar_prefetch = 0 : i64, scratch_operands = 1 : i64, tpu.core_type = #tpu.core_type<tc>, window_params = [{transform_indices = @transform_0, window_bounds = array<i64: 16, 256>}, {transform_indices = @transform_1, window_bounds = array<i64: 256, 128>}, {transform_indices = @transform_2, window_bounds = array<i64: 1, 128>}, {transform_indices = @transform_3, window_bounds = array<i64: 16, 128>}]} {
    %c0_i32 = arith.constant 0 : i32
    %0 = arith.cmpi eq, %arg2, %c0_i32 : i32
    %1 = arith.extui %0 : i1 to i32
    %c0_i32_0 = arith.constant 0 : i32
    %2 = arith.cmpi ne, %1, %c0_i32_0 : i32
    scf.if %2 {
      %cst_10 = arith.constant 0.000000e+00 : f32
      %12 = vector.broadcast %cst_10 : f32 to vector<16x128xf32>
      %c0_11 = arith.constant 0 : index
      %c0_12 = arith.constant 0 : index
      %13 = vector.load %arg7[%c0_11, %c0_12] : memref<16x128xf32, #tpu.memory_space<vmem>>, vector<16x128xf32>
      tpu.vector_store %arg7[%c0_11, %c0_12], %12 {strides = array<i32>} : memref<16x128xf32, #tpu.memory_space<vmem>>, vector<16x128xf32>,
    } else {
    }
    %c0 = arith.constant 0 : index
    %c0_1 = arith.constant 0 : index
    %3 = vector.load %arg7[%c0, %c0_1] : memref<16x128xf32, #tpu.memory_space<vmem>>, vector<16x128xf32>
    %c0_2 = arith.constant 0 : index
    %c0_3 = arith.constant 0 : index
    %4 = vector.load %arg3[%c0_2, %c0_3] : memref<16x256xbf16, #tpu.memory_space<vmem>>, vector<16x256xbf16>
    %c0_4 = arith.constant 0 : index
    %c0_5 = arith.constant 0 : index
    %5 = vector.load %arg4[%c0_4, %c0_5] : memref<256x128xbf16, #tpu.memory_space<vmem>>, vector<256x128xbf16>
    %cst = arith.constant dense<0.000000e+00> : vector<16x128xf32>
    %6 = tpu.matmul %4, %5, %cst {dimension_numbers = #tpu.dot_dimension_numbers<[1], [0], [0], [1], [0, 0, 1, 1], [], []>} : vector<16x256xbf16>, vector<256x128xbf16>, vector<16x128xf32> -> vector<16x128xf32>
    %7 = arith.addf %3, %6 : vector<16x128xf32>
    %c0_6 = arith.constant 0 : index
    %c0_7 = arith.constant 0 : index
    %8 = vector.load %arg7[%c0_6, %c0_7] : memref<16x128xf32, #tpu.memory_space<vmem>>, vector<16x128xf32>
    tpu.vector_store %arg7[%c0_6, %c0_7], %7 {strides = array<i32>} : memref<16x128xf32, #tpu.memory_space<vmem>>, vector<16x128xf32>,
    %c0_i32_8 = arith.constant 0 : i32
    %9 = arith.cmpi eq, %arg2, %c0_i32_8 : i32
    %10 = arith.extui %9 : i1 to i32
    %c0_i32_9 = arith.constant 0 : i32
    %11 = arith.cmpi ne, %10, %c0_i32_9 : i32
    scf.if %11 {
      %c0_10 = arith.constant 0 : index
      %c0_11 = arith.constant 0 : index
      %12 = vector.load %arg7[%c0_10, %c0_11] : memref<16x128xf32, #tpu.memory_space<vmem>>, vector<16x128xf32>
      %c0_12 = arith.constant 0 : index
      %c0_13 = arith.constant 0 : index
      %13 = vector.load %arg5[%c0_12, %c0_13] : memref<1x128xf32, #tpu.memory_space<vmem>>, vector<1x128xf32>
      %14 = vector.broadcast %13 : vector<1x128xf32> to vector<16x128xf32>
      %15 = arith.addf %12, %14 : vector<16x128xf32>
      %cst_14 = arith.constant 0.000000e+00 : f32
      %16 = vector.broadcast %cst_14 : f32 to vector<16x128xf32>
      %17 = arith.cmpf oge, %15, %16 : vector<16x128xf32>
      %cst_15 = arith.constant 0.00999999977 : f32
      %18 = vector.broadcast %cst_15 : f32 to vector<16x128xf32>
      %19 = arith.mulf %18, %15 : vector<16x128xf32>
      %20 = arith.select %17, %15, %19 : vector<16x128xi1>, vector<16x128xf32>
      %21 = arith.truncf %20 : vector<16x128xf32> to vector<16x128xbf16>
      %c0_16 = arith.constant 0 : index
      %c0_17 = arith.constant 0 : index
      %22 = vector.load %arg6[%c0_16, %c0_17] : memref<16x128xbf16, #tpu.memory_space<vmem>>, vector<16x128xbf16>
      tpu.vector_store %arg6[%c0_16, %c0_17], %21 {strides = array<i32>} : memref<16x128xbf16, #tpu.memory_space<vmem>>, vector<16x128xbf16>,
    } else {
    }
    return
  }
  func.func @transform_0(%arg0: i32, %arg1: i32, %arg2: i32) -> (i32, i32) {
    %c0_i32 = arith.constant 0 : i32
    return %arg0, %arg2 : i32, i32
  }
  func.func @transform_1(%arg0: i32, %arg1: i32, %arg2: i32) -> (i32, i32) {
    %c0_i32 = arith.constant 0 : i32
    return %arg2, %arg1 : i32, i32
  }
  func.func @transform_2(%arg0: i32, %arg1: i32, %arg2: i32) -> (i32, i32) {
    %c0_i32 = arith.constant 0 : i32
    %c0_i32_0 = arith.constant 0 : i32
    return %c0_i32, %arg1 : i32, i32
  }
  func.func @transform_3(%arg0: i32, %arg1: i32, %arg2: i32) -> (i32, i32) {
    %c0_i32 = arith.constant 0 : i32
    return %arg0, %arg1 : i32, i32
  }
}

</mosaic_0001>

<llo_original>
// kernel: discriminator_forward.6
$region0: #{discriminator_forward.6}
  #allocation0 [shape = 'u32[]', space=smem, size = 0x4, offset = 0x4, fixed_abs, tag = 'smem constant byte address 0x4 - core index']
  #allocation1 [shape = 'u32[144,128]{1,0:T(1,128)}', space=vmem, size = 0x12000, scoped, tag = 'internal scratch']
  #allocation2 [shape = 'f32[64,128]{1,0:T(8,128)}', space=vmem, size = 0x8000, scoped, tag = 'scratch operand']
  #allocation3 [shape = 'u32[2048]{0}', space=vmem, size = 0x2000, scoped, tag = 'scoped memory for discriminator_forward.6']
  #allocation4 [shape = 'u32[2048]{0}', space=vmem, size = 0x2000, scoped, tag = 'scoped memory for discriminator_forward.6']
  #allocation5 [shape = 'u32[2048]{0}', space=vmem, size = 0x2000, scoped, tag = 'scoped memory for discriminator_forward.6']
  #allocation6 [shape = 'u32[2048]{0}', space=vmem, size = 0x2000, scoped, tag = 'scoped memory for discriminator_forward.6']
  #allocation7 [shape = 'u32[2048]{0}', space=vmem, size = 0x2000, scoped, tag = 'scoped memory for discriminator_forward.6']
  %s0 = inlined_call_operand.vmem [shape: bf16[128,128], index: 0, kind: input, shape index: {}]
  %s1 = inlined_call_operand.vmem [shape: f32[1,128], index: 1, kind: input, shape index: {}]
  %s2 = inlined_call_operand.vmem [shape: bf16[128,48], index: 2, kind: input, shape index: {}]
  %s3 = inlined_call_operand.<no memory space> [shape: bf16[], index: 3, kind: input, shape index: {}]
  %s4 = inlined_call_operand.vmem [shape: bf16[128,128], index: 4, kind: output, shape index: {}]
  %s5 = sld [smem:[#allocation0]]
  $region53: #{discriminator_forward.6} parent=0
    _
  %s7 = ssub.s32 1, %s5
  %s8 = scalar_select 0, %s7, %s5
  %v9 = vstv %s3
  %v10 = vunpack.i.l.bf16 %v9
  %v12 = vunpack.i.h.bf16 %v9
  loop: start=0, step=1, limit=4
  $region2: #{discriminator_forward.6} parent=0 // loop_pre_header
    _
  $region3: #{discriminator_forward.6} parent=0 // loop_header
    %s15 = sphi 0, %s19
    %p16 = scmp.ge.s32.totalorder %s15, 4
    %s22 = sphi 0, %s41
    %s23 = sphi 0, %s37
    %s24 = sphi 0, %s33
    %s25 = sphi 0, %s22
    %s26 = sphi 0, %s23
    %s27 = sphi 0, %s24
    %s28 = sphi 0, %s25
    %s29 = sphi 0, %s26
    %s30 = sphi 0, %s27
    %s46 = sphi 0, %s48
    %s49 = sphi 0, %s46
    %s50 = sphi 0, %s49
    %s66 = sphi 0, %s50
    %s74 = sphi 0, %s76
    %s77 = sphi 0, %s74
    %s78 = sphi 0, %s77
    %s94 = sphi 0, %s78
    %s100 = sphi 0, %s102
    %s103 = sphi 0, %s100
    %s104 = sphi 0, %s103
    %s120 = sphi 0, %s104
    %s128 = sphi 0, %s130
    %s131 = sphi 0, %s128
    %s132 = sphi 0, %s131
    %s148 = sphi 0, %s132
  $region4: #{discriminator_forward.6} parent=0 // loop_header_branch
    %18 = sbr.rel (%p16) target = $region8
  $region5: #{discriminator_forward.6} parent=0 // loop_body
    %s20 = ssub.s32 %s15, 1
    %s21 = ssub.s32 %s15, 2
    %s31 = sadd.s32 1, %s24
    %p32 = scmp.ge.s32.totalorder %s31, 1
    %s33 = scalar_select %p32, 0, %s31
    %s34 = sadd.s32 1, %s23
    %s35 = scalar_select %p32, %s34, %s23
    %p36 = scmp.ge.s32.totalorder %s35, 1
    %s37 = scalar_select %p36, 0, %s35
    %s38 = sadd.s32 1, %s22
    %s39 = scalar_select %p36, %s38, %s22
    %p40 = scmp.ge.s32.totalorder %s39, 2
    %s41 = scalar_select %p40, 0, %s39
    %s42 = ssub.s32 %s22, %s41
    %s43 = ssub.s32 %s24, %s33
    %s44 = sor.u32 %s42, %s43
    %p45 = scmp.eq.s32.totalorder %s44, 0
    %s47 = sadd.s32 %s46, 1
    %s48 = scalar_select %p45, %s46, %s47
    %p51 = pneg %p45
    %p52 = scmp.eq.s32.totalorder %s15, 1
    %p53 = por %p51, %p52
    %p54 = scmp.ne.s32.totalorder %s46, %s49
    %p55 = scmp.eq.s32.totalorder %s15, 0
    %p56 = por %p54, %p55
    %p57 = scmp.ne.s32.totalorder %s46, %s49
    %p58 = scmp.eq.s32.totalorder %s20, 1
    %p59 = por %p57, %p58
    %p60 = scmp.ne.s32.totalorder %s49, %s50
    %p61 = scmp.eq.s32.totalorder %s20, 0
    %p62 = por %p60, %p61
    %p63 = scmp.ne.s32.totalorder %s49, %s50
    %p64 = scmp.eq.s32.totalorder %s21, 1
    %p65 = por %p63, %p64
    %p67 = scmp.ne.s32.totalorder %s50, %s66
    %p68 = scmp.eq.s32.totalorder %s21, 0
    %p69 = por %p67, %p68
    %s70 = ssub.s32 %s24, %s33
    %s71 = ssub.s32 %s23, %s37
    %s72 = sor.u32 %s70, %s71
    %p73 = scmp.eq.s32.totalorder %s72, 0
    %s75 = sadd.s32 %s74, 1
    %s76 = scalar_select %p73, %s74, %s75
    %p79 = pneg %p73
    %p80 = scmp.eq.s32.totalorder %s15, 1
    %p81 = por %p79, %p80
    %p82 = scmp.ne.s32.totalorder %s74, %s77
    %p83 = scmp.eq.s32.totalorder %s15, 0
    %p84 = por %p82, %p83
    %p85 = scmp.ne.s32.totalorder %s74, %s77
    %p86 = scmp.eq.s32.totalorder %s20, 1
    %p87 = por %p85, %p86
    %p88 = scmp.ne.s32.totalorder %s77, %s78
    %p89 = scmp.eq.s32.totalorder %s20, 0
    %p90 = por %p88, %p89
    %p91 = scmp.ne.s32.totalorder %s77, %s78
    %p92 = scmp.eq.s32.totalorder %s21, 1
    %p93 = por %p91, %p92
    %p95 = scmp.ne.s32.totalorder %s78, %s94
    %p96 = scmp.eq.s32.totalorder %s21, 0
    %p97 = por %p95, %p96
    %s98 = ssub.s32 %s23, %s37
    %p99 = scmp.eq.s32.totalorder %s98, 0
    %s101 = sadd.s32 %s100, 1
    %s102 = scalar_select %p99, %s100, %s101
    %p105 = pneg %p99
    %p106 = scmp.eq.s32.totalorder %s15, 1
    %p107 = por %p105, %p106
    %p108 = scmp.ne.s32.totalorder %s100, %s103
    %p109 = scmp.eq.s32.totalorder %s15, 0
    %p110 = por %p108, %p109
    %p111 = scmp.ne.s32.totalorder %s100, %s103
    %p112 = scmp.eq.s32.totalorder %s20, 1
    %p113 = por %p111, %p112
    %p114 = scmp.ne.s32.totalorder %s103, %s104
    %p115 = scmp.eq.s32.totalorder %s20, 0
    %p116 = por %p114, %p115
    %p117 = scmp.ne.s32.totalorder %s103, %s104
    %p118 = scmp.eq.s32.totalorder %s21, 1
    %p119 = por %p117, %p118
    %p121 = scmp.ne.s32.totalorder %s104, %s120
    %p122 = scmp.eq.s32.totalorder %s21, 0
    %p123 = por %p121, %p122
    %s124 = ssub.s32 %s22, %s41
    %s125 = ssub.s32 %s23, %s37
    %s126 = sor.u32 %s124, %s125
    %p127 = scmp.eq.s32.totalorder %s126, 0
    %s129 = sadd.s32 %s128, 1
    %s130 = scalar_select %p127, %s128, %s129
    %p133 = pneg %p127
    %p134 = scmp.eq.s32.totalorder %s15, 1
    %p135 = por %p133, %p134
    %p136 = scmp.ne.s32.totalorder %s128, %s131
    %p137 = scmp.eq.s32.totalorder %s15, 0
    %p138 = por %p136, %p137
    %p139 = scmp.ne.s32.totalorder %s128, %s131
    %p140 = scmp.eq.s32.totalorder %s20, 1
    %p141 = por %p139, %p140
    %p142 = scmp.ne.s32.totalorder %s131, %s132
    %p143 = scmp.eq.s32.totalorder %s20, 0
    %p144 = por %p142, %p143
    %p145 = scmp.ne.s32.totalorder %s131, %s132
    %p146 = scmp.eq.s32.totalorder %s21, 1
    %p147 = por %p145, %p146
    %p149 = scmp.ne.s32.totalorder %s132, %s148
    %p150 = scmp.eq.s32.totalorder %s21, 0
    %p151 = por %p149, %p150
    %p152 = scmp.le.s32.totalorder 1, %s15
    %p153 = scmp.lt.s32.totalorder %s15, 3
    %p154 = pnand %p152, %p153
    %p155 = pneg %p154
    // Predicated region
    $region9: #{discriminator_forward.6} parent=5 // pred_check
      _
    $region10: #{discriminator_forward.6} parent=5 // pred_check_branch
      %157 = sbr.rel (%p154) target = $region12
    $region11: #{discriminator_forward.6} parent=5 // pred_region
      %s158 = ssub.s32 %s15, 1
      // Predicated region
      $region13: #{discriminator_forward.6} parent=11 // pred_check
        %p159 = pneg %p90
      $region14: #{discriminator_forward.6} parent=11 // pred_check_branch
        %161 = sbr.rel (%p159) target = $region16
      $region15: #{discriminator_forward.6} parent=11 // pred_region
        %s162 = smul.u32 16, %s27
        %p163 = scmp.lt.s32.totalorder %s162, 15
        %s164 = scalar_select %p163, %s162, 15
        %p165 = scmp.lt.s32.totalorder %s26, 0
        %s166 = scalar_select %p165, %s26, 0
        %s167 = sadd.s32 %s166, %s164
        %s168 = smul.addr %s167, 4
        %s169 = scalar_lea.vmem %s0, %s168
        %s170 = smul.u32 16, %s27
      $region16: #{discriminator_forward.6} parent=11 // pred_fallthru
        _
      // Predicated region
      $region17: #{discriminator_forward.6} parent=11 // pred_check
        %p171 = pneg %p116
      $region18: #{discriminator_forward.6} parent=11 // pred_check_branch
        %173 = sbr.rel (%p171) target = $region20
      $region19: #{discriminator_forward.6} parent=11 // pred_region
        %p174 = scmp.lt.s32.totalorder %s26, 0
        %s175 = scalar_select %p174, %s26, 0
        %s176 = scalar_lea.vmem %s1, %s175
      $region20: #{discriminator_forward.6} parent=11 // pred_fallthru
        _
    $region12: #{discriminator_forward.6} parent=5 // pred_fallthru
      _
    %p177 = scmp.lt.s32.totalorder %s15, 2
    // Predicated region
    $region21: #{discriminator_forward.6} parent=5 // pred_check
      %p178 = pneg %p177
    $region22: #{discriminator_forward.6} parent=5 // pred_check_branch
      %180 = sbr.rel (%p178) target = $region24
    $region23: #{discriminator_forward.6} parent=5 // pred_region
      // Predicated region
      $region25: #{discriminator_forward.6} parent=23 // pred_check
        %p181 = pneg %p56
      $region26: #{discriminator_forward.6} parent=23 // pred_check_branch
        %183 = sbr.rel (%p181) target = $region28
      $region27: #{discriminator_forward.6} parent=23 // pred_region
        %s184 = smul.u32 8, %s22
        %s185 = ssub.s32 1, %s24
        %s186 = smul.u32 512, %s185
        %p187 = scmp.lt.s32.totalorder %s184, 15
        %s188 = scalar_select %p187, %s184, 15
        %p189 = scmp.lt.s32.totalorder %s24, 0
        %s190 = scalar_select %p189, %s24, 0
        %s191 = sadd.s32 %s190, %s188
        %s192 = smul.addr %s191, 4
        %s193 = scalar_lea.vmem %s2, %s192
        %s194 = smul.u32 8, %s22
        %s195 = ssub.s32 1, %s24
        %s196 = smul.u32 512, %s195
      $region28: #{discriminator_forward.6} parent=23 // pred_fallthru
        _
    $region24: #{discriminator_forward.6} parent=5 // pred_fallthru
      _
    %p197 = scmp.le.s32.totalorder 1, %s15
    %p198 = scmp.lt.s32.totalorder %s15, 3
    %p199 = pnand %p197, %p198
    %p200 = pneg %p199
    // Predicated region
    $region29: #{discriminator_forward.6} parent=5 // pred_check
      _
    $region30: #{discriminator_forward.6} parent=5 // pred_check_branch
      %202 = sbr.rel (%p199) target = $region32
    $region31: #{discriminator_forward.6} parent=5 // pred_region
      #allocation8 [shape = 'u8[16384]{0}', space=vmem, size = 0x4000, dematerialized = true, scoped, tag = 'FusionAdapter Buffer %fusion.1 = bf16[128,128]{1,0:T(8,128)(2,1)} fusion(%param_2.122, %param_3.53), kind=kLoop, calls=%fused_computation.62.clone, metadata={op_name="jit(discriminator_forward)/scatter" stack_frame_id=10}']
      %s203 = ssub.s32 %s15, 1
      %s204 = smul.u32 8, %s25
      %s205 = ssub.s32 1, %s27
      %s206 = smul.u32 512, %s205
      %p207 = scmp.lt.s32.totalorder %s204, 15
      %s208 = scalar_select %p207, %s204, 15
      %p209 = scmp.lt.s32.totalorder %s27, 0
      %s210 = scalar_select %p209, %s27, 0
      %s211 = sadd.s32 %s210, %s208
      %s212 = smul.addr %s211, 4
      %s213 = scalar_lea.vmem %s2, %s212
      %p214 = pneg %p62
      %p215 = pneg %p59
      %s216 = smul.u32 16, %s27
      %p217 = scmp.lt.s32.totalorder %s216, 15
      %s218 = scalar_select %p217, %s216, 15
      %p219 = scmp.lt.s32.totalorder %s26, 0
      %s220 = scalar_select %p219, %s26, 0
      %s221 = sadd.s32 %s220, %s218
      %s222 = smul.addr %s221, 4
      %s223 = scalar_lea.vmem %s0, %s222
      %p224 = pneg %p90
      %p225 = pneg %p87
      %p226 = scmp.lt.s32.totalorder %s26, 0
      %s227 = scalar_select %p226, %s26, 0
      %s228 = scalar_lea.vmem %s1, %s227
      %p229 = pneg %p116
      %p230 = pneg %p113
      %p231 = pneg %p144
      %p232 = pneg %p141
      %s233 = smul.u32 8, %s25
      %p234 = scmp.lt.s32.totalorder %s233, 15
      %s235 = scalar_select %p234, %s233, 15
      %p236 = scmp.lt.s32.totalorder %s26, 0
      %s237 = scalar_select %p236, %s26, 0
      %s238 = sadd.s32 %s237, %s235
      %s239 = smul.addr %s238, 4
      %s240 = scalar_lea.vmem %s4, %s239
      %s241 = smul.u32 8, %s25
      %s242 = ssub.s32 1, %s27
      %s243 = smul.u32 512, %s242
      %p244 = scmp.lt.s32.totalorder %s241, 15
      %s245 = scalar_select %p244, %s241, 15
      %p246 = scmp.lt.s32.totalorder %s27, 0
      %s247 = scalar_select %p246, %s27, 0
      %s248 = sadd.s32 %s247, %s245
      %s249 = smul.addr %s248, 4
      %s250 = scalar_lea.vmem %s2, %s249
      %s251 = smul.u32 8, %s25
      %s252 = ssub.s32 1, %s27
      %s253 = smul.u32 512, %s252
      %s254 = smul.u32 16, %s27
      %p255 = scmp.lt.s32.totalorder %s254, 15
      %s256 = scalar_select %p255, %s254, 15
      %p257 = scmp.lt.s32.totalorder %s26, 0
      %s258 = scalar_select %p257, %s26, 0
      %s259 = sadd.s32 %s258, %s256
      %s260 = smul.addr %s259, 4
      %s261 = scalar_lea.vmem %s0, %s260
      %s262 = smul.u32 16, %s27
      %p263 = scmp.lt.s32.totalorder %s26, 0
      %s264 = scalar_select %p263, %s26, 0
      %s265 = scalar_lea.vmem %s1, %s264
      %s266 = smul.u32 8, %s25
      %p267 = scmp.lt.s32.totalorder %s266, 15
      %s268 = scalar_select %p267, %s266, 15
      %p269 = scmp.lt.s32.totalorder %s26, 0
      %s270 = scalar_select %p269, %s26, 0
      %s271 = sadd.s32 %s270, %s268
      %s272 = smul.addr %s271, 4
      %s273 = scalar_lea.vmem %s4, %s272
      %s274 = smul.u32 8, %s25
      %s275 = ssub.s32 0, %s27
      %p276 = scmp.lt.s32.totalorder %s275, 0
      %s277 = scalar_select %p276, 0, 255
      %s278 = sshrl.u32 %s277, 1
      %s279 = sor.u32 %s277, %s278
      %s280 = sand.u32 %s279, 85
      %s281 = sshrl.u32 %s280, 1
      %s282 = sor.u32 %s280, %s281
      %s283 = sand.u32 51, %s282
      %s284 = sshrl.u32 %s283, 2
      %s285 = sor.u32 %s283, %s284
      %s286 = sand.u32 15, %s285
      %v287 = vld [vmem:[%s250] sm:%s286]
      %v288 = vunpack.c.l.bf16 %v287
      %v289 = vunpack.c.h.bf16 %v287
      %s290 = ssub.s32 0, %s27
      %v291 = vstv %s290
      %vm292 = vcmp.lt.s32.totalorder %v291, 0
      %v293 = vsel %vm292, %v10, %v288
      %s294 = smul.addr %s27, 128
      %v295 = vlaneseq
      %v296 = vand.u32 %v295, 127
      %v297 = vstv %s294
      %v298 = vadd.s32 %v296, %v297
      %vm299 = vcmp.lt.s32.totalorder %v298, 48
      %v300 = vsel %vm299, %v293, %v10
      %v301 = vpack.c.bf16 0.0, %v300
      %s303 = ssub.s32 16, 1
      %304 = vst [vmem:[#allocation8] sm:%s303] %v301
      %s305 = scalar_lea.vmem %s250, 4
      %s306 = ssub.s32 0, %s27
      %p307 = scmp.lt.s32.totalorder %s306, 0
      %s308 = scalar_select %p307, 0, 255
      %s309 = sshrl.u32 %s308, 1
      %s310 = sor.u32 %s308, %s309
      %s311 = sand.u32 %s310, 85
      %s312 = sshrl.u32 %s311, 1
      %s313 = sor.u32 %s311, %s312
      %s314 = sand.u32 51, %s313
      %s315 = sshrl.u32 %s314, 2
      %s316 = sor.u32 %s314, %s315
      %s317 = sand.u32 15, %s316
      %v318 = vld [vmem:[%s305] sm:%s317]
      %v319 = vunpack.c.l.bf16 %v318
      %v320 = vunpack.c.h.bf16 %v318
      %s321 = ssub.s32 0, %s27
      %v322 = vstv %s321
      %vm323 = vcmp.lt.s32.totalorder %v322, 0
      %v324 = vsel %vm323, %v10, %v319
      %s325 = smul.addr %s27, 128
      %v326 = vlaneseq
      %v327 = vand.u32 %v326, 127
      %v328 = vstv %s325
      %v329 = vadd.s32 %v327, %v328
      %vm330 = vcmp.lt.s32.totalorder %v329, 48
      %v331 = vsel %vm330, %v324, %v10
      %s332 = scalar_lea.vmem [#allocation8], 4
      %v333 = vpack.c.bf16 0.0, %v331
      %s335 = ssub.s32 16, 1
      %336 = vst [vmem:[%s332] sm:%s335] %v333
      %s337 = scalar_lea.vmem %s250, 8
      %s338 = ssub.s32 0, %s27
      %p339 = scmp.lt.s32.totalorder %s338, 0
      %s340 = scalar_select %p339, 0, 255
      %s341 = sshrl.u32 %s340, 1
      %s342 = sor.u32 %s340, %s341
      %s343 = sand.u32 %s342, 85
      %s344 = sshrl.u32 %s343, 1
      %s345 = sor.u32 %s343, %s344
      %s346 = sand.u32 51, %s345
      %s347 = sshrl.u32 %s346, 2
      %s348 = sor.u32 %s346, %s347
      %s349 = sand.u32 15, %s348
      %v350 = vld [vmem:[%s337] sm:%s349]
      %v351 = vunpack.c.l.bf16 %v350
      %v352 = vunpack.c.h.bf16 %v350
      %s353 = ssub.s32 0, %s27
      %v354 = vstv %s353
      %vm355 = vcmp.lt.s32.totalorder %v354, 0
      %v356 = vsel %vm355, %v10, %v351
      %s357 = smul.addr %s27, 128
      %v358 = vlaneseq
      %v359 = vand.u32 %v358, 127
      %v360 = vstv %s357
      %v361 = vadd.s32 %v359, %v360
      %vm362 = vcmp.lt.s32.totalorder %v361, 48
      %v363 = vsel %vm362, %v356, %v10
      %s364 = scalar_lea.vmem [#allocation8], 8
      %v365 = vpack.c.bf16 0.0, %v363
      %s367 = ssub.s32 16, 1
      %368 = vst [vmem:[%s364] sm:%s367] %v365
      %s369 = scalar_lea.vmem %s250, 12
      %s370 = ssub.s32 0, %s27
      %p371 = scmp.lt.s32.totalorder %s370, 0
      %s372 = scalar_select %p371, 0, 255
      %s373 = sshrl.u32 %s372, 1
      %s374 = sor.u32 %s372, %s373
      %s375 = sand.u32 %s374, 85
      %s376 = sshrl.u32 %s375, 1
      %s377 = sor.u32 %s375, %s376
      %s378 = sand.u32 51, %s377
      %s379 = sshrl.u32 %s378, 2
      %s380 = sor.u32 %s378, %s379
      %s381 = sand.u32 15, %s380
      %v382 = vld [vmem:[%s369] sm:%s381]
      %v383 = vunpack.c.l.bf16 %v382
      %v384 = vunpack.c.h.bf16 %v382
      %s385 = ssub.s32 0, %s27
      %v386 = vstv %s385
      %vm387 = vcmp.lt.s32.totalorder %v386, 0
      %v388 = vsel %vm387, %v10, %v383
      %s389 = smul.addr %s27, 128
      %v390 = vlaneseq
      %v391 = vand.u32 %v390, 127
      %v392 = vstv %s389
      %v393 = vadd.s32 %v391, %v392
      %vm394 = vcmp.lt.s32.totalorder %v393, 48
      %v395 = vsel %vm394, %v388, %v10
      %s396 = scalar_lea.vmem [#allocation8], 12
      %v397 = vpack.c.bf16 0.0, %v395
      %s399 = ssub.s32 16, 1
      %400 = vst [vmem:[%s396] sm:%s399] %v397
      %s401 = scalar_lea.vmem %s250, 16
      %s402 = ssub.s32 0, %s27
      %p403 = scmp.lt.s32.totalorder %s402, 0
      %s404 = scalar_select %p403, 0, 255
      %s405 = sshrl.u32 %s404, 1
      %s406 = sor.u32 %s404, %s405
      %s407 = sand.u32 %s406, 85
      %s408 = sshrl.u32 %s407, 1
      %s409 = sor.u32 %s407, %s408
      %s410 = sand.u32 51, %s409
      %s411 = sshrl.u32 %s410, 2
      %s412 = sor.u32 %s410, %s411
      %s413 = sand.u32 15, %s412
      %v414 = vld [vmem:[%s401] sm:%s413]
      %v415 = vunpack.c.l.bf16 %v414
      %v416 = vunpack.c.h.bf16 %v414
      %s417 = ssub.s32 0, %s27
      %v418 = vstv %s417
      %vm419 = vcmp.lt.s32.totalorder %v418, 0
      %v420 = vsel %vm419, %v10, %v415
      %s421 = smul.addr %s27, 128
      %v422 = vlaneseq
      %v423 = vand.u32 %v422, 127
      %v424 = vstv %s421
      %v425 = vadd.s32 %v423, %v424
      %vm426 = vcmp.lt.s32.totalorder %v425, 48
      %v427 = vsel %vm426, %v420, %v10
      %s428 = scalar_lea.vmem [#allocation8], 16
      %v429 = vpack.c.bf16 0.0, %v427
      %s431 = ssub.s32 16, 1
      %432 = vst [vmem:[%s428] sm:%s431] %v429
      %s433 = scalar_lea.vmem %s250, 20
      %s434 = ssub.s32 0, %s27
      %p435 = scmp.lt.s32.totalorder %s434, 0
      %s436 = scalar_select %p435, 0, 255
      %s437 = sshrl.u32 %s436, 1
      %s438 = sor.u32 %s436, %s437
      %s439 = sand.u32 %s438, 85
      %s440 = sshrl.u32 %s439, 1
      %s441 = sor.u32 %s439, %s440
      %s442 = sand.u32 51, %s441
      %s443 = sshrl.u32 %s442, 2
      %s444 = sor.u32 %s442, %s443
      %s445 = sand.u32 15, %s444
      %v446 = vld [vmem:[%s433] sm:%s445]
      %v447 = vunpack.c.l.bf16 %v446
      %v448 = vunpack.c.h.bf16 %v446
      %s449 = ssub.s32 0, %s27
      %v450 = vstv %s449
      %vm451 = vcmp.lt.s32.totalorder %v450, 0
      %v452 = vsel %vm451, %v10, %v447
      %s453 = smul.addr %s27, 128
      %v454 = vlaneseq
      %v455 = vand.u32 %v454, 127
      %v456 = vstv %s453
      %v457 = vadd.s32 %v455, %v456
      %vm458 = vcmp.lt.s32.totalorder %v457, 48
      %v459 = vsel %vm458, %v452, %v10
      %s460 = scalar_lea.vmem [#allocation8], 20
      %v461 = vpack.c.bf16 0.0, %v459
      %s463 = ssub.s32 16, 1
      %464 = vst [vmem:[%s460] sm:%s463] %v461
      %s465 = scalar_lea.vmem %s250, 24
      %s466 = ssub.s32 0, %s27
      %p467 = scmp.lt.s32.totalorder %s466, 0
      %s468 = scalar_select %p467, 0, 255
      %s469 = sshrl.u32 %s468, 1
      %s470 = sor.u32 %s468, %s469
      %s471 = sand.u32 %s470, 85
      %s472 = sshrl.u32 %s471, 1
      %s473 = sor.u32 %s471, %s472
      %s474 = sand.u32 51, %s473
      %s475 = sshrl.u32 %s474, 2
      %s476 = sor.u32 %s474, %s475
      %s477 = sand.u32 15, %s476
      %v478 = vld [vmem:[%s465] sm:%s477]
      %v479 = vunpack.c.l.bf16 %v478
      %v480 = vunpack.c.h.bf16 %v478
      %s481 = ssub.s32 0, %s27
      %v482 = vstv %s481
      %vm483 = vcmp.lt.s32.totalorder %v482, 0
      %v484 = vsel %vm483, %v10, %v479
      %s485 = smul.addr %s27, 128
      %v486 = vlaneseq
      %v487 = vand.u32 %v486, 127
      %v488 = vstv %s485
      %v489 = vadd.s32 %v487, %v488
      %vm490 = vcmp.lt.s32.totalorder %v489, 48
      %v491 = vsel %vm490, %v484, %v10
      %s492 = scalar_lea.vmem [#allocation8], 24
      %v493 = vpack.c.bf16 0.0, %v491
      %s495 = ssub.s32 16, 1
      %496 = vst [vmem:[%s492] sm:%s495] %v493
      %s497 = scalar_lea.vmem %s250, 28
      %s498 = ssub.s32 0, %s27
      %p499 = scmp.lt.s32.totalorder %s498, 0
      %s500 = scalar_select %p499, 0, 255
      %s501 = sshrl.u32 %s500, 1
      %s502 = sor.u32 %s500, %s501
      %s503 = sand.u32 %s502, 85
      %s504 = sshrl.u32 %s503, 1
      %s505 = sor.u32 %s503, %s504
      %s506 = sand.u32 51, %s505
      %s507 = sshrl.u32 %s506, 2
      %s508 = sor.u32 %s506, %s507
      %s509 = sand.u32 15, %s508
      %v510 = vld [vmem:[%s497] sm:%s509]
      %v511 = vunpack.c.l.bf16 %v510
      %v512 = vunpack.c.h.bf16 %v510
      %s513 = ssub.s32 0, %s27
      %v514 = vstv %s513
      %vm515 = vcmp.lt.s32.totalorder %v514, 0
      %v516 = vsel %vm515, %v10, %v511
      %s517 = smul.addr %s27, 128
      %v518 = vlaneseq
      %v519 = vand.u32 %v518, 127
      %v520 = vstv %s517
      %v521 = vadd.s32 %v519, %v520
      %vm522 = vcmp.lt.s32.totalorder %v521, 48
      %v523 = vsel %vm522, %v516, %v10
      %s524 = scalar_lea.vmem [#allocation8], 28
      %v525 = vpack.c.bf16 0.0, %v523
      %s527 = ssub.s32 16, 1
      %528 = vst [vmem:[%s524] sm:%s527] %v525
      %p530 = scmp.eq.s32.totalorder %s27, 0
      // Predicated region
      $region33: #{discriminator_forward.6} parent=31 // pred_check
        %p531 = pneg %p530
      $region34: #{discriminator_forward.6} parent=31 // pred_check_branch
        %533 = sbr.rel (%p531) target = $region36
      $region35: #{discriminator_forward.6} parent=31 // pred_region
        %534 = vst [vmem:[#allocation2] sm:$0xff] 0.0
        %535 = vst [vmem:[#allocation2 + $0x8] sm:$0xff] 0.0
        %536 = vst [vmem:[#allocation2 + $0x10] sm:$0xff] 0.0
        %537 = vst [vmem:[#allocation2 + $0x18] sm:$0xff] 0.0
        %538 = vst [vmem:[#allocation2 + $0x20] sm:$0xff] 0.0
        %539 = vst [vmem:[#allocation2 + $0x28] sm:$0xff] 0.0
        %540 = vst [vmem:[#allocation2 + $0x30] sm:$0xff] 0.0
        %541 = vst [vmem:[#allocation2 + $0x38] sm:$0xff] 0.0
      $region36: #{discriminator_forward.6} parent=31 // pred_fallthru
        _
      %v542 = vld [vmem:[#allocation2] sm:$0xff]
      %v543 = vld [vmem:[#allocation2 + $0x8] sm:$0xff]
      %v544 = vld [vmem:[#allocation2 + $0x10] sm:$0xff]
      %v545 = vld [vmem:[#allocation2 + $0x18] sm:$0xff]
      %v546 = vld [vmem:[#allocation2 + $0x20] sm:$0xff]
      %v547 = vld [vmem:[#allocation2 + $0x28] sm:$0xff]
      %v548 = vld [vmem:[#allocation2 + $0x30] sm:$0xff]
      %v549 = vld [vmem:[#allocation2 + $0x38] sm:$0xff]
      %v550 = vld [vmem:[#allocation8] sm:$0xf]
      %v551 = vld [vmem:[#allocation8 + $0x4] sm:$0xf]
      %v552 = vld [vmem:[#allocation8 + $0x8] sm:$0xf]
      %v553 = vld [vmem:[#allocation8 + $0xc] sm:$0xf]
      %v554 = vld [vmem:[#allocation8 + $0x10] sm:$0xf]
      %v555 = vld [vmem:[#allocation8 + $0x14] sm:$0xf]
      %v556 = vld [vmem:[#allocation8 + $0x18] sm:$0xf]
      %v557 = vld [vmem:[#allocation8 + $0x1c] sm:$0xf]
      %v558 = vld [vmem:[%s261] sm:$0xf]
      %v559 = vld [vmem:[%s261 + $0x4] sm:$0xf]
      %v560 = vld [vmem:[%s261 + $0x8] sm:$0xf]
      %v561 = vld [vmem:[%s261 + $0xc] sm:$0xf]
      %v562 = vld [vmem:[%s261 + $0x10] sm:$0xf]
      %v563 = vld [vmem:[%s261 + $0x14] sm:$0xf]
      %v564 = vld [vmem:[%s261 + $0x18] sm:$0xf]
      %v565 = vld [vmem:[%s261 + $0x1c] sm:$0xf]
      %v566 = vld [vmem:[%s261 + $0x20] sm:$0xf]
      %v567 = vld [vmem:[%s261 + $0x24] sm:$0xf]
      %v568 = vld [vmem:[%s261 + $0x28] sm:$0xf]
      %v569 = vld [vmem:[%s261 + $0x2c] sm:$0xf]
      %v570 = vld [vmem:[%s261 + $0x30] sm:$0xf]
      %v571 = vld [vmem:[%s261 + $0x34] sm:$0xf]
      %v572 = vld [vmem:[%s261 + $0x38] sm:$0xf]
      %v573 = vld [vmem:[%s261 + $0x3c] sm:$0xf]
      %v582 = vunpack.c.l.b16 %v550
      %v583 = vunpack.c.l.b16 %v551
      %v584 = vunpack.c.l.b16 %v552
      %v585 = vunpack.c.l.b16 %v553
      %v586 = vunpack.c.l.b16 %v554
      %v587 = vunpack.c.l.b16 %v555
      %v588 = vunpack.c.l.b16 %v556
      %v589 = vunpack.c.l.b16 %v557
      %v590 = vpack.c.b16 %v583, %v582
      %v591 = vpack.c.b16 %v585, %v584
      %v592 = vpack.c.b16 %v587, %v586
      %v593 = vpack.c.b16 %v589, %v588
      %v614 = vunpack.c.l.b16 %v558
      %v615 = vunpack.c.l.b16 %v559
      %v616 = vunpack.c.l.b16 %v560
      %v617 = vunpack.c.l.b16 %v561
      %v618 = vunpack.c.l.b16 %v562
      %v619 = vunpack.c.l.b16 %v563
      %v620 = vunpack.c.l.b16 %v564
      %v621 = vunpack.c.l.b16 %v565
      %v622 = vunpack.c.l.b16 %v566
      %v623 = vunpack.c.l.b16 %v567
      %v624 = vunpack.c.l.b16 %v568
      %v625 = vunpack.c.l.b16 %v569
      %v626 = vunpack.c.l.b16 %v570
      %v627 = vunpack.c.l.b16 %v571
      %v628 = vunpack.c.l.b16 %v572
      %v629 = vunpack.c.l.b16 %v573
      %v630 = vpack.c.b16 %v615, %v614
      %v631 = vpack.c.b16 %v617, %v616
      %v632 = vpack.c.b16 %v619, %v618
      %v633 = vpack.c.b16 %v621, %v620
      %v634 = vpack.c.b16 %v623, %v622
      %v635 = vpack.c.b16 %v625, %v624
      %v636 = vpack.c.b16 %v627, %v626
      %v637 = vpack.c.b16 %v629, %v628
      %646 = vmatprep.subr.bf16.mxu0 0
      %647 = vmatpush1.bf16.msra.mxu0 %v637
      %648 = vmatprep.subr.bf16.mxu0 0
      %649 = vmatpush1.bf16.msra.mxu0 %v636
      %650 = vmatprep.subr.bf16.mxu0 0
      %651 = vmatpush1.bf16.msra.mxu0 %v635
      %652 = vmatprep.subr.bf16.mxu0 0
      %653 = vmatpush1.bf16.msra.mxu0 %v634
      %654 = vmatprep.subr.bf16.mxu0 0
      %655 = vmatpush1.bf16.msra.mxu0 %v633
      %656 = vmatprep.subr.bf16.mxu0 0
      %657 = vmatpush1.bf16.msra.mxu0 %v632
      %658 = vmatprep.subr.bf16.mxu0 0
      %659 = vmatpush1.bf16.msra.mxu0 %v631
      %660 = vmatprep.subr.bf16.mxu0 0
      %661 = vmatpush1.bf16.msra.mxu0 %v630
      %662 = vmatprep.subr.bf16.mxu0 0
      %663 = vmatpush2.bf16.msra.mxu0 0
      %664 = vmatprep.subr.bf16.mxu0 0
      %665 = vmatpush2.bf16.msra.mxu0 0
      %666 = vmatprep.subr.bf16.mxu0 0
      %667 = vmatpush2.bf16.msra.mxu0 0
      %668 = vmatprep.subr.bf16.mxu0 0
      %669 = vmatpush2.bf16.msra.mxu0 0
      %670 = vmatprep.subr.bf16.mxu0 0
      %671 = vmatpush2.bf16.msra.mxu0 0
      %672 = vmatprep.subr.bf16.mxu0 0
      %673 = vmatpush2.bf16.msra.mxu0 0
      %674 = vmatprep.subr.bf16.mxu0 0
      %675 = vmatpush2.bf16.msra.mxu0 0
      %676 = vmatprep.subr.bf16.mxu0 0
      %677 = vmatpush2.bf16.msra.mxu0 0
      %678 = vmatprep.mubr.bf16.mxu0 0
      %679 = vmatmul.mubr.bf16.gmra.mxu0 %v590
      %v680 = vpop.f32.mrf.mxu0
      %v681 = vadd.f32 0.0, %v680
      %v682 = vpop.f32.mrf.mxu0
      %v683 = vpop.f32.mrf.mxu0
      %v684 = vadd.f32 0.0, %v683
      %v685 = vpop.f32.mrf.mxu0
      %686 = vmatprep.mubr.bf16.mxu0 0
      %687 = vmatmul.mubr.bf16.gmra.mxu0 %v591
      %v688 = vpop.f32.mrf.mxu0
      %v689 = vadd.f32 0.0, %v688
      %v690 = vpop.f32.mrf.mxu0
      %v691 = vpop.f32.mrf.mxu0
      %v692 = vadd.f32 0.0, %v691
      %v693 = vpop.f32.mrf.mxu0
      %694 = vmatprep.mubr.bf16.mxu0 0
      %695 = vmatmul.mubr.bf16.gmra.mxu0 %v592
      %v696 = vpop.f32.mrf.mxu0
      %v697 = vadd.f32 0.0, %v696
      %v698 = vpop.f32.mrf.mxu0
      %v699 = vpop.f32.mrf.mxu0
      %v700 = vadd.f32 0.0, %v699
      %v701 = vpop.f32.mrf.mxu0
      %702 = vmatprep.mubr.bf16.mxu0 0
      %703 = vmatmul.mubr.bf16.gmra.mxu0 %v593
      %v704 = vpop.f32.mrf.mxu0
      %v705 = vadd.f32 0.0, %v704
      %v706 = vpop.f32.mrf.mxu0
      %v707 = vpop.f32.mrf.mxu0
      %v708 = vadd.f32 0.0, %v707
      %v709 = vpop.f32.mrf.mxu0
      %710 = vdwg.mxu0
      %v711 = vadd.f32 %v542, %v681
      %v712 = vadd.f32 %v543, %v684
      %v713 = vadd.f32 %v544, %v689
      %v714 = vadd.f32 %v545, %v692
      %v715 = vadd.f32 %v546, %v697
      %v716 = vadd.f32 %v547, %v700
      %v717 = vadd.f32 %v548, %v705
      %v718 = vadd.f32 %v549, %v708
      %719 = vst [vmem:[#allocation2] sm:$0xff] %v711
      %720 = vst [vmem:[#allocation2 + $0x8] sm:$0xff] %v712
      %721 = vst [vmem:[#allocation2 + $0x10] sm:$0xff] %v713
      %722 = vst [vmem:[#allocation2 + $0x18] sm:$0xff] %v714
      %723 = vst [vmem:[#allocation2 + $0x20] sm:$0xff] %v715
      %724 = vst [vmem:[#allocation2 + $0x28] sm:$0xff] %v716
      %725 = vst [vmem:[#allocation2 + $0x30] sm:$0xff] %v717
      %726 = vst [vmem:[#allocation2 + $0x38] sm:$0xff] %v718
      // Predicated region
      $region37: #{discriminator_forward.6} parent=31 // pred_check
        %p727 = pneg %p530
      $region38: #{discriminator_forward.6} parent=31 // pred_check_branch
        %729 = sbr.rel (%p727) target = $region40
      $region39: #{discriminator_forward.6} parent=31 // pred_region
        %v730 = vld [vmem:[#allocation2] sm:$0xff]
        %v731 = vld [vmem:[#allocation2 + $0x8] sm:$0xff]
        %v732 = vld [vmem:[#allocation2 + $0x10] sm:$0xff]
        %v733 = vld [vmem:[#allocation2 + $0x18] sm:$0xff]
        %v734 = vld [vmem:[#allocation2 + $0x20] sm:$0xff]
        %v735 = vld [vmem:[#allocation2 + $0x28] sm:$0xff]
        %v736 = vld [vmem:[#allocation2 + $0x30] sm:$0xff]
        %v737 = vld [vmem:[#allocation2 + $0x38] sm:$0xff]
        %v738 = vld [vmem:[%s265] sm:$0x1]
        %v740 = vlaneseq
        %v741 = vshrl.u32 %v740, 7
        %v742 = vsub.s32 0, %v741
        %v743 = vrot.slane %v738, %v742
        %v745 = vadd.f32 %v730, %v743
        %v746 = vadd.f32 %v731, %v743
        %v747 = vadd.f32 %v732, %v743
        %v748 = vadd.f32 %v733, %v743
        %v749 = vadd.f32 %v734, %v743
        %v750 = vadd.f32 %v735, %v743
        %v751 = vadd.f32 %v736, %v743
        %v752 = vadd.f32 %v737, %v743
        %vm753 = vcmp.ge.f32.partialorder %v745, 0.0
        %vm754 = vcmp.ge.f32.partialorder %v746, 0.0
        %vm755 = vcmp.ge.f32.partialorder %v747, 0.0
        %vm756 = vcmp.ge.f32.partialorder %v748, 0.0
        %vm757 = vcmp.ge.f32.partialorder %v749, 0.0
        %vm758 = vcmp.ge.f32.partialorder %v750, 0.0
        %vm759 = vcmp.ge.f32.partialorder %v751, 0.0
        %vm760 = vcmp.ge.f32.partialorder %v752, 0.0
        %v761 = vmul.f32 %v745, 0.01
        %v762 = vmul.f32 %v746, 0.01
        %v763 = vmul.f32 %v747, 0.01
        %v764 = vmul.f32 %v748, 0.01
        %v765 = vmul.f32 %v749, 0.01
        %v766 = vmul.f32 %v750, 0.01
        %v767 = vmul.f32 %v751, 0.01
        %v768 = vmul.f32 %v752, 0.01
        %v769 = vsel %vm753, %v745, %v761
        %v770 = vsel %vm754, %v746, %v762
        %v771 = vsel %vm755, %v747, %v763
        %v772 = vsel %vm756, %v748, %v764
        %v773 = vsel %vm757, %v749, %v765
        %v774 = vsel %vm758, %v750, %v766
        %v775 = vsel %vm759, %v751, %v767
        %v776 = vsel %vm760, %v752, %v768
        %v777 = vpack.c.bf16 %v770, %v769
        %v778 = vpack.c.bf16 %v772, %v771
        %v779 = vpack.c.bf16 %v774, %v773
        %v780 = vpack.c.bf16 %v776, %v775
        %v785 = vunpack.c.l.b16 %v777
        %v786 = vunpack.c.h.b16 %v777
        %v787 = vunpack.c.l.b16 %v778
        %v788 = vunpack.c.h.b16 %v778
        %v789 = vunpack.c.l.b16 %v779
        %v790 = vunpack.c.h.b16 %v779
        %v791 = vunpack.c.l.b16 %v780
        %v792 = vunpack.c.h.b16 %v780
        %v793 = vpack.c.b16 %v785, %v785
        %v794 = vpack.c.b16 %v786, %v786
        %v795 = vpack.c.b16 %v787, %v787
        %v796 = vpack.c.b16 %v788, %v788
        %v797 = vpack.c.b16 %v789, %v789
        %v798 = vpack.c.b16 %v790, %v790
        %v799 = vpack.c.b16 %v791, %v791
        %v800 = vpack.c.b16 %v792, %v792
        %809 = vst [vmem:[%s273] sm:$0xf] %v793
        %810 = vst [vmem:[%s273 + $0x4] sm:$0xf] %v794
        %811 = vst [vmem:[%s273 + $0x8] sm:$0xf] %v795
        %812 = vst [vmem:[%s273 + $0xc] sm:$0xf] %v796
        %813 = vst [vmem:[%s273 + $0x10] sm:$0xf] %v797
        %814 = vst [vmem:[%s273 + $0x14] sm:$0xf] %v798
        %815 = vst [vmem:[%s273 + $0x18] sm:$0xf] %v799
        %816 = vst [vmem:[%s273 + $0x1c] sm:$0xf] %v800
      $region40: #{discriminator_forward.6} parent=31 // pred_fallthru
        _
      %s817 = smul.u32 8, %s25
      %p818 = scmp.lt.s32.totalorder %s817, 15
      %s819 = scalar_select %p818, %s817, 15
      %p820 = scmp.lt.s32.totalorder %s26, 0
      %s821 = scalar_select %p820, %s26, 0
      %s822 = sadd.s32 %s821, %s819
      %s823 = smul.addr %s822, 4
      %s824 = scalar_lea.vmem %s4, %s823
      // Predicated region
      $region41: #{discriminator_forward.6} parent=31 // pred_check
        %p825 = pneg %p141
      $region42: #{discriminator_forward.6} parent=31 // pred_check_branch
        %827 = sbr.rel (%p825) target = $region44
      $region43: #{discriminator_forward.6} parent=31 // pred_region
        %s828 = smul.u32 8, %s25
      $region44: #{discriminator_forward.6} parent=31 // pred_fallthru
        _
    $region32: #{discriminator_forward.6} parent=5 // pred_fallthru
      _
    %p829 = scmp.le.s32.totalorder 2, %s15
    // Predicated region
    $region45: #{discriminator_forward.6} parent=5 // pred_check
      %p830 = pneg %p829
    $region46: #{discriminator_forward.6} parent=5 // pred_check_branch
      %832 = sbr.rel (%p830) target = $region48
    $region47: #{discriminator_forward.6} parent=5 // pred_region
      %s833 = ssub.s32 %s15, 2
      // Predicated region
      $region49: #{discriminator_forward.6} parent=47 // pred_check
        %p834 = pneg %p147
      $region50: #{discriminator_forward.6} parent=47 // pred_check_branch
        %836 = sbr.rel (%p834) target = $region52
      $region51: #{discriminator_forward.6} parent=47 // pred_region
        %s837 = smul.u32 8, %s28
        %p838 = scmp.lt.s32.totalorder %s837, 15
        %s839 = scalar_select %p838, %s837, 15
        %p840 = scmp.lt.s32.totalorder %s29, 0
        %s841 = scalar_select %p840, %s29, 0
        %s842 = sadd.s32 %s841, %s839
        %s843 = smul.addr %s842, 4
        %s844 = scalar_lea.vmem %s4, %s843
      $region52: #{discriminator_forward.6} parent=47 // pred_fallthru
        _
    $region48: #{discriminator_forward.6} parent=5 // pred_fallthru
      _
  $region6: #{discriminator_forward.6} parent=0 // loop_footer
    %s19 = sadd.s32 1, %s15
  $region7: #{discriminator_forward.6} parent=0 // loop_footer_branch
    %14 = sbr.rel target = $region3
  $region8: #{discriminator_forward.6} parent=0 // loop_exit
    _

// kernel: discriminator_forward.5
$region0: #{discriminator_forward.5}
  #allocation0 [shape = 'u32[]', space=smem, size = 0x4, offset = 0x4, fixed_abs, tag = 'smem constant byte address 0x4 - core index']
  #allocation1 [shape = 'u32[144,128]{1,0:T(1,128)}', space=vmem, size = 0x12000, scoped, tag = 'internal scratch']
  #allocation2 [shape = 'f32[16,128]{1,0:T(8,128)}', space=vmem, size = 0x2000, scoped, tag = 'scratch operand']
  %s0 = inlined_call_operand.vmem [shape: bf16[32,128], index: 0, kind: input, shape index: {}]
  %s1 = inlined_call_operand.vmem [shape: bf16[128,128], index: 1, kind: input, shape index: {}]
  %s2 = inlined_call_operand.vmem [shape: f32[1,128], index: 2, kind: input, shape index: {}]
  %s3 = inlined_call_operand.vmem [shape: bf16[32,128], index: 3, kind: output, shape index: {}]
  %s4 = sld [smem:[#allocation0]]
  $region53: #{discriminator_forward.5} parent=0
    _
  %s6 = ssub.s32 1, %s4
  %s7 = scalar_select 0, %s6, %s4
  loop: start=0, step=1, limit=4
  $region2: #{discriminator_forward.5} parent=0 // loop_pre_header
    _
  $region3: #{discriminator_forward.5} parent=0 // loop_header
    %s9 = sphi 0, %s13
    %p10 = scmp.ge.s32.totalorder %s9, 4
    %s16 = sphi 0, %s35
    %s17 = sphi 0, %s31
    %s18 = sphi 0, %s27
    %s19 = sphi 0, %s16
    %s20 = sphi 0, %s17
    %s21 = sphi 0, %s18
    %s22 = sphi 0, %s19
    %s23 = sphi 0, %s20
    %s24 = sphi 0, %s21
    %s40 = sphi 0, %s42
    %s43 = sphi 0, %s40
    %s44 = sphi 0, %s43
    %s60 = sphi 0, %s44
    %s68 = sphi 0, %s70
    %s71 = sphi 0, %s68
    %s72 = sphi 0, %s71
    %s88 = sphi 0, %s72
    %s94 = sphi 0, %s96
    %s97 = sphi 0, %s94
    %s98 = sphi 0, %s97
    %s114 = sphi 0, %s98
    %s122 = sphi 0, %s124
    %s125 = sphi 0, %s122
    %s126 = sphi 0, %s125
    %s142 = sphi 0, %s126
  $region4: #{discriminator_forward.5} parent=0 // loop_header_branch
    %12 = sbr.rel (%p10) target = $region8
  $region5: #{discriminator_forward.5} parent=0 // loop_body
    %s14 = ssub.s32 %s9, 1
    %s15 = ssub.s32 %s9, 2
    %s25 = sadd.s32 1, %s18
    %p26 = scmp.ge.s32.totalorder %s25, 1
    %s27 = scalar_select %p26, 0, %s25
    %s28 = sadd.s32 1, %s17
    %s29 = scalar_select %p26, %s28, %s17
    %p30 = scmp.ge.s32.totalorder %s29, 1
    %s31 = scalar_select %p30, 0, %s29
    %s32 = sadd.s32 1, %s16
    %s33 = scalar_select %p30, %s32, %s16
    %p34 = scmp.ge.s32.totalorder %s33, 2
    %s35 = scalar_select %p34, 0, %s33
    %s36 = ssub.s32 %s16, %s35
    %s37 = ssub.s32 %s18, %s27
    %s38 = sor.u32 %s36, %s37
    %p39 = scmp.eq.s32.totalorder %s38, 0
    %s41 = sadd.s32 %s40, 1
    %s42 = scalar_select %p39, %s40, %s41
    %p45 = pneg %p39
    %p46 = scmp.eq.s32.totalorder %s9, 1
    %p47 = por %p45, %p46
    %p48 = scmp.ne.s32.totalorder %s40, %s43
    %p49 = scmp.eq.s32.totalorder %s9, 0
    %p50 = por %p48, %p49
    %p51 = scmp.ne.s32.totalorder %s40, %s43
    %p52 = scmp.eq.s32.totalorder %s14, 1
    %p53 = por %p51, %p52
    %p54 = scmp.ne.s32.totalorder %s43, %s44
    %p55 = scmp.eq.s32.totalorder %s14, 0
    %p56 = por %p54, %p55
    %p57 = scmp.ne.s32.totalorder %s43, %s44
    %p58 = scmp.eq.s32.totalorder %s15, 1
    %p59 = por %p57, %p58
    %p61 = scmp.ne.s32.totalorder %s44, %s60
    %p62 = scmp.eq.s32.totalorder %s15, 0
    %p63 = por %p61, %p62
    %s64 = ssub.s32 %s18, %s27
    %s65 = ssub.s32 %s17, %s31
    %s66 = sor.u32 %s64, %s65
    %p67 = scmp.eq.s32.totalorder %s66, 0
    %s69 = sadd.s32 %s68, 1
    %s70 = scalar_select %p67, %s68, %s69
    %p73 = pneg %p67
    %p74 = scmp.eq.s32.totalorder %s9, 1
    %p75 = por %p73, %p74
    %p76 = scmp.ne.s32.totalorder %s68, %s71
    %p77 = scmp.eq.s32.totalorder %s9, 0
    %p78 = por %p76, %p77
    %p79 = scmp.ne.s32.totalorder %s68, %s71
    %p80 = scmp.eq.s32.totalorder %s14, 1
    %p81 = por %p79, %p80
    %p82 = scmp.ne.s32.totalorder %s71, %s72
    %p83 = scmp.eq.s32.totalorder %s14, 0
    %p84 = por %p82, %p83
    %p85 = scmp.ne.s32.totalorder %s71, %s72
    %p86 = scmp.eq.s32.totalorder %s15, 1
    %p87 = por %p85, %p86
    %p89 = scmp.ne.s32.totalorder %s72, %s88
    %p90 = scmp.eq.s32.totalorder %s15, 0
    %p91 = por %p89, %p90
    %s92 = ssub.s32 %s17, %s31
    %p93 = scmp.eq.s32.totalorder %s92, 0
    %s95 = sadd.s32 %s94, 1
    %s96 = scalar_select %p93, %s94, %s95
    %p99 = pneg %p93
    %p100 = scmp.eq.s32.totalorder %s9, 1
    %p101 = por %p99, %p100
    %p102 = scmp.ne.s32.totalorder %s94, %s97
    %p103 = scmp.eq.s32.totalorder %s9, 0
    %p104 = por %p102, %p103
    %p105 = scmp.ne.s32.totalorder %s94, %s97
    %p106 = scmp.eq.s32.totalorder %s14, 1
    %p107 = por %p105, %p106
    %p108 = scmp.ne.s32.totalorder %s97, %s98
    %p109 = scmp.eq.s32.totalorder %s14, 0
    %p110 = por %p108, %p109
    %p111 = scmp.ne.s32.totalorder %s97, %s98
    %p112 = scmp.eq.s32.totalorder %s15, 1
    %p113 = por %p111, %p112
    %p115 = scmp.ne.s32.totalorder %s98, %s114
    %p116 = scmp.eq.s32.totalorder %s15, 0
    %p117 = por %p115, %p116
    %s118 = ssub.s32 %s16, %s35
    %s119 = ssub.s32 %s17, %s31
    %s120 = sor.u32 %s118, %s119
    %p121 = scmp.eq.s32.totalorder %s120, 0
    %s123 = sadd.s32 %s122, 1
    %s124 = scalar_select %p121, %s122, %s123
    %p127 = pneg %p121
    %p128 = scmp.eq.s32.totalorder %s9, 1
    %p129 = por %p127, %p128
    %p130 = scmp.ne.s32.totalorder %s122, %s125
    %p131 = scmp.eq.s32.totalorder %s9, 0
    %p132 = por %p130, %p131
    %p133 = scmp.ne.s32.totalorder %s122, %s125
    %p134 = scmp.eq.s32.totalorder %s14, 1
    %p135 = por %p133, %p134
    %p136 = scmp.ne.s32.totalorder %s125, %s126
    %p137 = scmp.eq.s32.totalorder %s14, 0
    %p138 = por %p136, %p137
    %p139 = scmp.ne.s32.totalorder %s125, %s126
    %p140 = scmp.eq.s32.totalorder %s15, 1
    %p141 = por %p139, %p140
    %p143 = scmp.ne.s32.totalorder %s126, %s142
    %p144 = scmp.eq.s32.totalorder %s15, 0
    %p145 = por %p143, %p144
    %p146 = scmp.le.s32.totalorder 1, %s9
    %p147 = scmp.lt.s32.totalorder %s9, 3
    %p148 = pnand %p146, %p147
    %p149 = pneg %p148
    // Predicated region
    $region9: #{discriminator_forward.5} parent=5 // pred_check
      _
    $region10: #{discriminator_forward.5} parent=5 // pred_check_branch
      %151 = sbr.rel (%p148) target = $region12
    $region11: #{discriminator_forward.5} parent=5 // pred_region
      %s152 = ssub.s32 %s9, 1
      // Predicated region
      $region13: #{discriminator_forward.5} parent=11 // pred_check
        %p153 = pneg %p84
      $region14: #{discriminator_forward.5} parent=11 // pred_check_branch
        %155 = sbr.rel (%p153) target = $region16
      $region15: #{discriminator_forward.5} parent=11 // pred_region
        %s156 = smul.u32 16, %s21
        %p157 = scmp.lt.s32.totalorder %s156, 15
        %s158 = scalar_select %p157, %s156, 15
        %p159 = scmp.lt.s32.totalorder %s20, 0
        %s160 = scalar_select %p159, %s20, 0
        %s161 = sadd.s32 %s160, %s158
        %s162 = smul.addr %s161, 4
        %s163 = scalar_lea.vmem %s1, %s162
        %s164 = smul.u32 16, %s21
      $region16: #{discriminator_forward.5} parent=11 // pred_fallthru
        _
      // Predicated region
      $region17: #{discriminator_forward.5} parent=11 // pred_check
        %p165 = pneg %p110
      $region18: #{discriminator_forward.5} parent=11 // pred_check_branch
        %167 = sbr.rel (%p165) target = $region20
      $region19: #{discriminator_forward.5} parent=11 // pred_region
        %p168 = scmp.lt.s32.totalorder %s20, 0
        %s169 = scalar_select %p168, %s20, 0
        %s170 = scalar_lea.vmem %s2, %s169
      $region20: #{discriminator_forward.5} parent=11 // pred_fallthru
        _
    $region12: #{discriminator_forward.5} parent=5 // pred_fallthru
      _
    %p171 = scmp.lt.s32.totalorder %s9, 2
    // Predicated region
    $region21: #{discriminator_forward.5} parent=5 // pred_check
      %p172 = pneg %p171
    $region22: #{discriminator_forward.5} parent=5 // pred_check_branch
      %174 = sbr.rel (%p172) target = $region24
    $region23: #{discriminator_forward.5} parent=5 // pred_region
      // Predicated region
      $region25: #{discriminator_forward.5} parent=23 // pred_check
        %p175 = pneg %p50
      $region26: #{discriminator_forward.5} parent=23 // pred_check_branch
        %177 = sbr.rel (%p175) target = $region28
      $region27: #{discriminator_forward.5} parent=23 // pred_region
        %s178 = smul.u32 2, %s16
        %p179 = scmp.lt.s32.totalorder %s178, 3
        %s180 = scalar_select %p179, %s178, 3
        %p181 = scmp.lt.s32.totalorder %s18, 0
        %s182 = scalar_select %p181, %s18, 0
        %s183 = sadd.s32 %s182, %s180
        %s184 = smul.addr %s183, 4
        %s185 = scalar_lea.vmem %s0, %s184
        %s186 = smul.u32 2, %s16
      $region28: #{discriminator_forward.5} parent=23 // pred_fallthru
        _
    $region24: #{discriminator_forward.5} parent=5 // pred_fallthru
      _
    %p187 = scmp.le.s32.totalorder 1, %s9
    %p188 = scmp.lt.s32.totalorder %s9, 3
    %p189 = pnand %p187, %p188
    %p190 = pneg %p189
    // Predicated region
    $region29: #{discriminator_forward.5} parent=5 // pred_check
      _
    $region30: #{discriminator_forward.5} parent=5 // pred_check_branch
      %192 = sbr.rel (%p189) target = $region32
    $region31: #{discriminator_forward.5} parent=5 // pred_region
      %s193 = ssub.s32 %s9, 1
      %s194 = smul.u32 2, %s19
      %p195 = scmp.lt.s32.totalorder %s194, 3
      %s196 = scalar_select %p195, %s194, 3
      %p197 = scmp.lt.s32.totalorder %s21, 0
      %s198 = scalar_select %p197, %s21, 0
      %s199 = sadd.s32 %s198, %s196
      %s200 = smul.addr %s199, 4
      %s201 = scalar_lea.vmem %s0, %s200
      %p202 = pneg %p56
      %p203 = pneg %p53
      %s204 = smul.u32 16, %s21
      %p205 = scmp.lt.s32.totalorder %s204, 15
      %s206 = scalar_select %p205, %s204, 15
      %p207 = scmp.lt.s32.totalorder %s20, 0
      %s208 = scalar_select %p207, %s20, 0
      %s209 = sadd.s32 %s208, %s206
      %s210 = smul.addr %s209, 4
      %s211 = scalar_lea.vmem %s1, %s210
      %p212 = pneg %p84
      %p213 = pneg %p81
      %p214 = scmp.lt.s32.totalorder %s20, 0
      %s215 = scalar_select %p214, %s20, 0
      %s216 = scalar_lea.vmem %s2, %s215
      %p217 = pneg %p110
      %p218 = pneg %p107
      %p219 = pneg %p138
      %p220 = pneg %p135
      %s221 = smul.u32 2, %s19
      %p222 = scmp.lt.s32.totalorder %s221, 3
      %s223 = scalar_select %p222, %s221, 3
      %p224 = scmp.lt.s32.totalorder %s20, 0
      %s225 = scalar_select %p224, %s20, 0
      %s226 = sadd.s32 %s225, %s223
      %s227 = smul.addr %s226, 4
      %s228 = scalar_lea.vmem %s3, %s227
      %s229 = smul.u32 2, %s19
      %p230 = scmp.lt.s32.totalorder %s229, 3
      %s231 = scalar_select %p230, %s229, 3
      %p232 = scmp.lt.s32.totalorder %s21, 0
      %s233 = scalar_select %p232, %s21, 0
      %s234 = sadd.s32 %s233, %s231
      %s235 = smul.addr %s234, 4
      %s236 = scalar_lea.vmem %s0, %s235
      %s237 = smul.u32 2, %s19
      %s238 = smul.u32 16, %s21
      %p239 = scmp.lt.s32.totalorder %s238, 15
      %s240 = scalar_select %p239, %s238, 15
      %p241 = scmp.lt.s32.totalorder %s20, 0
      %s242 = scalar_select %p241, %s20, 0
      %s243 = sadd.s32 %s242, %s240
      %s244 = smul.addr %s243, 4
      %s245 = scalar_lea.vmem %s1, %s244
      %s246 = smul.u32 16, %s21
      %p247 = scmp.lt.s32.totalorder %s20, 0
      %s248 = scalar_select %p247, %s20, 0
      %s249 = scalar_lea.vmem %s2, %s248
      %s250 = smul.u32 2, %s19
      %p251 = scmp.lt.s32.totalorder %s250, 3
      %s252 = scalar_select %p251, %s250, 3
      %p253 = scmp.lt.s32.totalorder %s20, 0
      %s254 = scalar_select %p253, %s20, 0
      %s255 = sadd.s32 %s254, %s252
      %s256 = smul.addr %s255, 4
      %s257 = scalar_lea.vmem %s3, %s256
      %s258 = smul.u32 2, %s19
      %p260 = scmp.eq.s32.totalorder %s21, 0
      // Predicated region
      $region33: #{discriminator_forward.5} parent=31 // pred_check
        %p261 = pneg %p260
      $region34: #{discriminator_forward.5} parent=31 // pred_check_branch
        %263 = sbr.rel (%p261) target = $region36
      $region35: #{discriminator_forward.5} parent=31 // pred_region
        %264 = vst [vmem:[#allocation2] sm:$0xff] 0.0
        %265 = vst [vmem:[#allocation2 + $0x8] sm:$0xff] 0.0
      $region36: #{discriminator_forward.5} parent=31 // pred_fallthru
        _
      %v266 = vld [vmem:[#allocation2] sm:$0xff]
      %v267 = vld [vmem:[#allocation2 + $0x8] sm:$0xff]
      %v268 = vld [vmem:[%s236] sm:$0xf]
      %v269 = vld [vmem:[%s236 + $0x4] sm:$0xf]
      %v270 = vld [vmem:[%s245] sm:$0xf]
      %v271 = vld [vmem:[%s245 + $0x4] sm:$0xf]
      %v272 = vld [vmem:[%s245 + $0x8] sm:$0xf]
      %v273 = vld [vmem:[%s245 + $0xc] sm:$0xf]
      %v274 = vld [vmem:[%s245 + $0x10] sm:$0xf]
      %v275 = vld [vmem:[%s245 + $0x14] sm:$0xf]
      %v276 = vld [vmem:[%s245 + $0x18] sm:$0xf]
      %v277 = vld [vmem:[%s245 + $0x1c] sm:$0xf]
      %v278 = vld [vmem:[%s245 + $0x20] sm:$0xf]
      %v279 = vld [vmem:[%s245 + $0x24] sm:$0xf]
      %v280 = vld [vmem:[%s245 + $0x28] sm:$0xf]
      %v281 = vld [vmem:[%s245 + $0x2c] sm:$0xf]
      %v282 = vld [vmem:[%s245 + $0x30] sm:$0xf]
      %v283 = vld [vmem:[%s245 + $0x34] sm:$0xf]
      %v284 = vld [vmem:[%s245 + $0x38] sm:$0xf]
      %v285 = vld [vmem:[%s245 + $0x3c] sm:$0xf]
      %v288 = vunpack.c.l.b16 %v268
      %v289 = vunpack.c.l.b16 %v269
      %v290 = vpack.c.b16 %v289, %v288
      %v308 = vunpack.c.l.b16 %v270
      %v309 = vunpack.c.l.b16 %v271
      %v310 = vunpack.c.l.b16 %v272
      %v311 = vunpack.c.l.b16 %v273
      %v312 = vunpack.c.l.b16 %v274
      %v313 = vunpack.c.l.b16 %v275
      %v314 = vunpack.c.l.b16 %v276
      %v315 = vunpack.c.l.b16 %v277
      %v316 = vunpack.c.l.b16 %v278
      %v317 = vunpack.c.l.b16 %v279
      %v318 = vunpack.c.l.b16 %v280
      %v319 = vunpack.c.l.b16 %v281
      %v320 = vunpack.c.l.b16 %v282
      %v321 = vunpack.c.l.b16 %v283
      %v322 = vunpack.c.l.b16 %v284
      %v323 = vunpack.c.l.b16 %v285
      %v324 = vpack.c.b16 %v309, %v308
      %v325 = vpack.c.b16 %v311, %v310
      %v326 = vpack.c.b16 %v313, %v312
      %v327 = vpack.c.b16 %v315, %v314
      %v328 = vpack.c.b16 %v317, %v316
      %v329 = vpack.c.b16 %v319, %v318
      %v330 = vpack.c.b16 %v321, %v320
      %v331 = vpack.c.b16 %v323, %v322
      %340 = vmatprep.subr.bf16.mxu0 0
      %341 = vmatpush1.bf16.msra.mxu0 %v331
      %342 = vmatprep.subr.bf16.mxu0 0
      %343 = vmatpush1.bf16.msra.mxu0 %v330
      %344 = vmatprep.subr.bf16.mxu0 0
      %345 = vmatpush1.bf16.msra.mxu0 %v329
      %346 = vmatprep.subr.bf16.mxu0 0
      %347 = vmatpush1.bf16.msra.mxu0 %v328
      %348 = vmatprep.subr.bf16.mxu0 0
      %349 = vmatpush1.bf16.msra.mxu0 %v327
      %350 = vmatprep.subr.bf16.mxu0 0
      %351 = vmatpush1.bf16.msra.mxu0 %v326
      %352 = vmatprep.subr.bf16.mxu0 0
      %353 = vmatpush1.bf16.msra.mxu0 %v325
      %354 = vmatprep.subr.bf16.mxu0 0
      %355 = vmatpush1.bf16.msra.mxu0 %v324
      %356 = vmatprep.subr.bf16.mxu0 0
      %357 = vmatpush2.bf16.msra.mxu0 0
      %358 = vmatprep.subr.bf16.mxu0 0
      %359 = vmatpush2.bf16.msra.mxu0 0
      %360 = vmatprep.subr.bf16.mxu0 0
      %361 = vmatpush2.bf16.msra.mxu0 0
      %362 = vmatprep.subr.bf16.mxu0 0
      %363 = vmatpush2.bf16.msra.mxu0 0
      %364 = vmatprep.subr.bf16.mxu0 0
      %365 = vmatpush2.bf16.msra.mxu0 0
      %366 = vmatprep.subr.bf16.mxu0 0
      %367 = vmatpush2.bf16.msra.mxu0 0
      %368 = vmatprep.subr.bf16.mxu0 0
      %369 = vmatpush2.bf16.msra.mxu0 0
      %370 = vmatprep.subr.bf16.mxu0 0
      %371 = vmatpush2.bf16.msra.mxu0 0
      %372 = vmatprep.mubr.bf16.mxu0 0
      %373 = vmatmul.mubr.bf16.gmra.mxu0 %v290
      %v374 = vpop.f32.mrf.mxu0
      %v375 = vadd.f32 0.0, %v374
      %v376 = vpop.f32.mrf.mxu0
      %v377 = vpop.f32.mrf.mxu0
      %v378 = vadd.f32 0.0, %v377
      %v379 = vpop.f32.mrf.mxu0
      %380 = vdwg.mxu0
      %v381 = vadd.f32 %v266, %v375
      %v382 = vadd.f32 %v267, %v378
      %383 = vst [vmem:[#allocation2] sm:$0xff] %v381
      %384 = vst [vmem:[#allocation2 + $0x8] sm:$0xff] %v382
      // Predicated region
      $region37: #{discriminator_forward.5} parent=31 // pred_check
        %p385 = pneg %p260
      $region38: #{discriminator_forward.5} parent=31 // pred_check_branch
        %387 = sbr.rel (%p385) target = $region40
      $region39: #{discriminator_forward.5} parent=31 // pred_region
        %v388 = vld [vmem:[#allocation2] sm:$0xff]
        %v389 = vld [vmem:[#allocation2 + $0x8] sm:$0xff]
        %v390 = vld [vmem:[%s249] sm:$0x1]
        %v392 = vlaneseq
        %v393 = vshrl.u32 %v392, 7
        %v394 = vsub.s32 0, %v393
        %v395 = vrot.slane %v390, %v394
        %v397 = vadd.f32 %v388, %v395
        %v398 = vadd.f32 %v389, %v395
        %vm399 = vcmp.ge.f32.partialorder %v397, 0.0
        %vm400 = vcmp.ge.f32.partialorder %v398, 0.0
        %v401 = vmul.f32 %v397, 0.01
        %v402 = vmul.f32 %v398, 0.01
        %v403 = vsel %vm399, %v397, %v401
        %v404 = vsel %vm400, %v398, %v402
        %v405 = vpack.c.bf16 %v404, %v403
        %v407 = vunpack.c.l.b16 %v405
        %v408 = vunpack.c.h.b16 %v405
        %v409 = vpack.c.b16 %v407, %v407
        %v410 = vpack.c.b16 %v408, %v408
        %413 = vst [vmem:[%s257] sm:$0xf] %v409
        %414 = vst [vmem:[%s257 + $0x4] sm:$0xf] %v410
      $region40: #{discriminator_forward.5} parent=31 // pred_fallthru
        _
      %s415 = smul.u32 2, %s19
      %p416 = scmp.lt.s32.totalorder %s415, 3
      %s417 = scalar_select %p416, %s415, 3
      %p418 = scmp.lt.s32.totalorder %s20, 0
      %s419 = scalar_select %p418, %s20, 0
      %s420 = sadd.s32 %s419, %s417
      %s421 = smul.addr %s420, 4
      %s422 = scalar_lea.vmem %s3, %s421
      // Predicated region
      $region41: #{discriminator_forward.5} parent=31 // pred_check
        %p423 = pneg %p135
      $region42: #{discriminator_forward.5} parent=31 // pred_check_branch
        %425 = sbr.rel (%p423) target = $region44
      $region43: #{discriminator_forward.5} parent=31 // pred_region
        %s426 = smul.u32 2, %s19
      $region44: #{discriminator_forward.5} parent=31 // pred_fallthru
        _
    $region32: #{discriminator_forward.5} parent=5 // pred_fallthru
      _
    %p427 = scmp.le.s32.totalorder 2, %s9
    // Predicated region
    $region45: #{discriminator_forward.5} parent=5 // pred_check
      %p428 = pneg %p427
    $region46: #{discriminator_forward.5} parent=5 // pred_check_branch
      %430 = sbr.rel (%p428) target = $region48
    $region47: #{discriminator_forward.5} parent=5 // pred_region
      %s431 = ssub.s32 %s9, 2
      // Predicated region
      $region49: #{discriminator_forward.5} parent=47 // pred_check
        %p432 = pneg %p141
      $region50: #{discriminator_forward.5} parent=47 // pred_check_branch
        %434 = sbr.rel (%p432) target = $region52
      $region51: #{discriminator_forward.5} parent=47 // pred_region
        %s435 = smul.u32 2, %s22
        %p436 = scmp.lt.s32.totalorder %s435, 3
        %s437 = scalar_select %p436, %s435, 3
        %p438 = scmp.lt.s32.totalorder %s23, 0
        %s439 = scalar_select %p438, %s23, 0
        %s440 = sadd.s32 %s439, %s437
        %s441 = smul.addr %s440, 4
        %s442 = scalar_lea.vmem %s3, %s441
      $region52: #{discriminator_forward.5} parent=47 // pred_fallthru
        _
    $region48: #{discriminator_forward.5} parent=5 // pred_fallthru
      _
  $region6: #{discriminator_forward.5} parent=0 // loop_footer
    %s13 = sadd.s32 1, %s9
  $region7: #{discriminator_forward.5} parent=0 // loop_footer_branch
    %8 = sbr.rel target = $region3
  $region8: #{discriminator_forward.5} parent=0 // loop_exit
    _

// kernel: discriminator_forward.7
$region0: #{discriminator_forward.7}
  #allocation0 [shape = 'u32[]', space=smem, size = 0x4, offset = 0x4, fixed_abs, tag = 'smem constant byte address 0x4 - core index']
  #allocation1 [shape = 'u32[144,128]{1,0:T(1,128)}', space=vmem, size = 0x12000, scoped, tag = 'internal scratch']
  #allocation2 [shape = 'f32[16,128]{1,0:T(8,128)}', space=vmem, size = 0x2000, scoped, tag = 'scratch operand']
  #allocation3 [shape = 'u32[2048]{0}', space=vmem, size = 0x2000, scoped, tag = 'scoped memory for discriminator_forward.7']
  #allocation4 [shape = 'u32[2048]{0}', space=vmem, size = 0x2000, scoped, tag = 'scoped memory for discriminator_forward.7']
  #allocation5 [shape = 'u32[2048]{0}', space=vmem, size = 0x2000, scoped, tag = 'scoped memory for discriminator_forward.7']
  #allocation6 [shape = 'u32[2048]{0}', space=vmem, size = 0x2000, scoped, tag = 'scoped memory for discriminator_forward.7']
  #allocation7 [shape = 'u32[2048]{0}', space=vmem, size = 0x2000, scoped, tag = 'scoped memory for discriminator_forward.7']
  %s0 = inlined_call_operand.vmem [shape: bf16[256,128], index: 0, kind: input, shape index: {}]
  %s1 = inlined_call_operand.vmem [shape: f32[1,128], index: 1, kind: input, shape index: {}]
  %s2 = inlined_call_operand.vmem [shape: bf16[8,256], index: 2, kind: input, shape index: {}]
  %s3 = inlined_call_operand.<no memory space> [shape: bf16[], index: 3, kind: input, shape index: {}]
  %s4 = inlined_call_operand.vmem [shape: bf16[16,128], index: 4, kind: output, shape index: {}]
  %s5 = sld [smem:[#allocation0]]
  $region30: #{discriminator_forward.7} parent=0
    _
  %s7 = ssub.s32 1, %s5
  %s8 = scalar_select 0, %s7, %s5
  %v9 = vstv %s3
  %v10 = vunpack.i.l.bf16 %v9
  %v12 = vunpack.i.h.bf16 %v9
  $region1: #{discriminator_forward.7} parent=0
    #allocation8 [shape = 'u8[8192]{0}', space=vmem, size = 0x2000, dematerialized = true, scoped, tag = 'FusionAdapter Buffer %fusion.3 = bf16[16,256]{1,0:T(8,128)(2,1)} fusion(%param_2.142, %param_3.54), kind=kLoop, calls=%fused_computation.74.clone, metadata={op_name="jit(discriminator_forward)/scatter" stack_frame_id=10}']
    // Predicated region
    $region2: #{discriminator_forward.7} parent=1 // pred_check
      _
    $region3: #{discriminator_forward.7} parent=1 // pred_check_branch
      %15 = sbr.rel (0) target = $region5
    $region4: #{discriminator_forward.7} parent=1 // pred_region
      _
    $region5: #{discriminator_forward.7} parent=1 // pred_fallthru
      _
    // Predicated region
    $region6: #{discriminator_forward.7} parent=1 // pred_check
      _
    $region7: #{discriminator_forward.7} parent=1 // pred_check_branch
      %17 = sbr.rel (0) target = $region9
    $region8: #{discriminator_forward.7} parent=1 // pred_region
      _
    $region9: #{discriminator_forward.7} parent=1 // pred_fallthru
      _
    // Predicated region
    $region10: #{discriminator_forward.7} parent=1 // pred_check
      _
    $region11: #{discriminator_forward.7} parent=1 // pred_check_branch
      %19 = sbr.rel (0) target = $region13
    $region12: #{discriminator_forward.7} parent=1 // pred_region
      _
    $region13: #{discriminator_forward.7} parent=1 // pred_fallthru
      _
    %s21 = sor.u32 255, 127
    %s22 = sand.u32 %s21, 85
    %s23 = sshrl.u32 %s22, 1
    %s24 = sor.u32 %s22, %s23
    %s25 = sand.u32 51, %s24
    %s26 = sshrl.u32 %s25, 2
    %s27 = sor.u32 %s25, %s26
    %s28 = sand.u32 15, %s27
    %v29 = vld [vmem:[%s2] sm:%s28]
    %v30 = vunpack.c.l.bf16 %v29
    %v31 = vunpack.c.h.bf16 %v29
    %v32 = vpack.c.bf16 0.0, %v30
    %s34 = ssub.s32 16, 1
    %35 = vst [vmem:[#allocation8] sm:%s34] %v32
    %s36 = scalar_lea.vmem %s2, 4
    %s38 = sor.u32 255, 127
    %s39 = sand.u32 %s38, 85
    %s40 = sshrl.u32 %s39, 1
    %s41 = sor.u32 %s39, %s40
    %s42 = sand.u32 51, %s41
    %s43 = sshrl.u32 %s42, 2
    %s44 = sor.u32 %s42, %s43
    %s45 = sand.u32 15, %s44
    %v46 = vld [vmem:[%s36] sm:%s45]
    %v47 = vunpack.c.l.bf16 %v46
    %v48 = vunpack.c.h.bf16 %v46
    %s49 = scalar_lea.vmem [#allocation8], 4
    %v50 = vpack.c.bf16 0.0, %v47
    %s52 = ssub.s32 16, 1
    %53 = vst [vmem:[%s49] sm:%s52] %v50
    %s54 = scalar_lea.vmem [#allocation8], 8
    %v55 = vpack.c.bf16 0.0, %v10
    %s57 = ssub.s32 16, 1
    %58 = vst [vmem:[%s54] sm:%s57] %v55
    %s59 = scalar_lea.vmem [#allocation8], 12
    %v60 = vpack.c.bf16 0.0, %v10
    %s62 = ssub.s32 16, 1
    %63 = vst [vmem:[%s59] sm:%s62] %v60
    %p65 = scmp.eq.s32.totalorder 0, 0
    // Predicated region
    $region14: #{discriminator_forward.7} parent=1 // pred_check
      %p66 = pneg %p65
    $region15: #{discriminator_forward.7} parent=1 // pred_check_branch
      %68 = sbr.rel (%p66) target = $region17
    $region16: #{discriminator_forward.7} parent=1 // pred_region
      %69 = vst [vmem:[#allocation2] sm:$0xff] 0.0
      %70 = vst [vmem:[#allocation2 + $0x8] sm:$0xff] 0.0
    $region17: #{discriminator_forward.7} parent=1 // pred_fallthru
      _
    %v71 = vld [vmem:[#allocation2] sm:$0xff]
    %v72 = vld [vmem:[#allocation2 + $0x8] sm:$0xff]
    %v73 = vld [vmem:[#allocation8] sm:$0xff]
    %v74 = vld [vmem:[#allocation8 + $0x8] sm:$0xff]
    %v75 = vld [vmem:[%s0] sm:$0xf]
    %v76 = vld [vmem:[%s0 + $0x4] sm:$0xf]
    %v77 = vld [vmem:[%s0 + $0x8] sm:$0xf]
    %v78 = vld [vmem:[%s0 + $0xc] sm:$0xf]
    %v79 = vld [vmem:[%s0 + $0x10] sm:$0xf]
    %v80 = vld [vmem:[%s0 + $0x14] sm:$0xf]
    %v81 = vld [vmem:[%s0 + $0x18] sm:$0xf]
    %v82 = vld [vmem:[%s0 + $0x1c] sm:$0xf]
    %v83 = vld [vmem:[%s0 + $0x20] sm:$0xf]
    %v84 = vld [vmem:[%s0 + $0x24] sm:$0xf]
    %v85 = vld [vmem:[%s0 + $0x28] sm:$0xf]
    %v86 = vld [vmem:[%s0 + $0x2c] sm:$0xf]
    %v87 = vld [vmem:[%s0 + $0x30] sm:$0xf]
    %v88 = vld [vmem:[%s0 + $0x34] sm:$0xf]
    %v89 = vld [vmem:[%s0 + $0x38] sm:$0xf]
    %v90 = vld [vmem:[%s0 + $0x3c] sm:$0xf]
    %v91 = vld [vmem:[%s0 + $0x40] sm:$0xf]
    %v92 = vld [vmem:[%s0 + $0x44] sm:$0xf]
    %v93 = vld [vmem:[%s0 + $0x48] sm:$0xf]
    %v94 = vld [vmem:[%s0 + $0x4c] sm:$0xf]
    %v95 = vld [vmem:[%s0 + $0x50] sm:$0xf]
    %v96 = vld [vmem:[%s0 + $0x54] sm:$0xf]
    %v97 = vld [vmem:[%s0 + $0x58] sm:$0xf]
    %v98 = vld [vmem:[%s0 + $0x5c] sm:$0xf]
    %v99 = vld [vmem:[%s0 + $0x60] sm:$0xf]
    %v100 = vld [vmem:[%s0 + $0x64] sm:$0xf]
    %v101 = vld [vmem:[%s0 + $0x68] sm:$0xf]
    %v102 = vld [vmem:[%s0 + $0x6c] sm:$0xf]
    %v103 = vld [vmem:[%s0 + $0x70] sm:$0xf]
    %v104 = vld [vmem:[%s0 + $0x74] sm:$0xf]
    %v105 = vld [vmem:[%s0 + $0x78] sm:$0xf]
    %v106 = vld [vmem:[%s0 + $0x7c] sm:$0xf]
    %v109 = vunpack.c.l.b16 %v73
    %v110 = vunpack.c.h.b16 %v73
    %v111 = vunpack.c.l.b16 %v74
    %v112 = vunpack.c.h.b16 %v74
    %v113 = vpack.c.b16 %v111, %v109
    %v114 = vpack.c.b16 %v112, %v110
    %v149 = vunpack.c.l.b16 %v75
    %v150 = vunpack.c.l.b16 %v76
    %v151 = vunpack.c.l.b16 %v77
    %v152 = vunpack.c.l.b16 %v78
    %v153 = vunpack.c.l.b16 %v79
    %v154 = vunpack.c.l.b16 %v80
    %v155 = vunpack.c.l.b16 %v81
    %v156 = vunpack.c.l.b16 %v82
    %v157 = vunpack.c.l.b16 %v83
    %v158 = vunpack.c.l.b16 %v84
    %v159 = vunpack.c.l.b16 %v85
    %v160 = vunpack.c.l.b16 %v86
    %v161 = vunpack.c.l.b16 %v87
    %v162 = vunpack.c.l.b16 %v88
    %v163 = vunpack.c.l.b16 %v89
    %v164 = vunpack.c.l.b16 %v90
    %v165 = vunpack.c.l.b16 %v91
    %v166 = vunpack.c.l.b16 %v92
    %v167 = vunpack.c.l.b16 %v93
    %v168 = vunpack.c.l.b16 %v94
    %v169 = vunpack.c.l.b16 %v95
    %v170 = vunpack.c.l.b16 %v96
    %v171 = vunpack.c.l.b16 %v97
    %v172 = vunpack.c.l.b16 %v98
    %v173 = vunpack.c.l.b16 %v99
    %v174 = vunpack.c.l.b16 %v100
    %v175 = vunpack.c.l.b16 %v101
    %v176 = vunpack.c.l.b16 %v102
    %v177 = vunpack.c.l.b16 %v103
    %v178 = vunpack.c.l.b16 %v104
    %v179 = vunpack.c.l.b16 %v105
    %v180 = vunpack.c.l.b16 %v106
    %v181 = vpack.c.b16 %v150, %v149
    %v182 = vpack.c.b16 %v152, %v151
    %v183 = vpack.c.b16 %v154, %v153
    %v184 = vpack.c.b16 %v156, %v155
    %v185 = vpack.c.b16 %v158, %v157
    %v186 = vpack.c.b16 %v160, %v159
    %v187 = vpack.c.b16 %v162, %v161
    %v188 = vpack.c.b16 %v164, %v163
    %v189 = vpack.c.b16 %v166, %v165
    %v190 = vpack.c.b16 %v168, %v167
    %v191 = vpack.c.b16 %v170, %v169
    %v192 = vpack.c.b16 %v172, %v171
    %v193 = vpack.c.b16 %v174, %v173
    %v194 = vpack.c.b16 %v176, %v175
    %v195 = vpack.c.b16 %v178, %v177
    %v196 = vpack.c.b16 %v180, %v179
    %213 = vmatprep.subr.bf16.mxu0 0
    %214 = vmatpush1.bf16.msra.mxu0 %v188
    %215 = vmatprep.subr.bf16.mxu0 0
    %216 = vmatpush1.bf16.msra.mxu0 %v187
    %217 = vmatprep.subr.bf16.mxu0 0
    %218 = vmatpush1.bf16.msra.mxu0 %v186
    %219 = vmatprep.subr.bf16.mxu0 0
    %220 = vmatpush1.bf16.msra.mxu0 %v185
    %221 = vmatprep.subr.bf16.mxu0 0
    %222 = vmatpush1.bf16.msra.mxu0 %v184
    %223 = vmatprep.subr.bf16.mxu0 0
    %224 = vmatpush1.bf16.msra.mxu0 %v183
    %225 = vmatprep.subr.bf16.mxu0 0
    %226 = vmatpush1.bf16.msra.mxu0 %v182
    %227 = vmatprep.subr.bf16.mxu0 0
    %228 = vmatpush1.bf16.msra.mxu0 %v181
    %229 = vmatprep.subr.bf16.mxu0 0
    %230 = vmatpush2.bf16.msra.mxu0 %v196
    %231 = vmatprep.subr.bf16.mxu0 0
    %232 = vmatpush2.bf16.msra.mxu0 %v195
    %233 = vmatprep.subr.bf16.mxu0 0
    %234 = vmatpush2.bf16.msra.mxu0 %v194
    %235 = vmatprep.subr.bf16.mxu0 0
    %236 = vmatpush2.bf16.msra.mxu0 %v193
    %237 = vmatprep.subr.bf16.mxu0 0
    %238 = vmatpush2.bf16.msra.mxu0 %v192
    %239 = vmatprep.subr.bf16.mxu0 0
    %240 = vmatpush2.bf16.msra.mxu0 %v191
    %241 = vmatprep.subr.bf16.mxu0 0
    %242 = vmatpush2.bf16.msra.mxu0 %v190
    %243 = vmatprep.subr.bf16.mxu0 0
    %244 = vmatpush2.bf16.msra.mxu0 %v189
    %245 = vmatprep.mubr.bf16.mxu0 %v114
    %246 = vmatmul.mubr.bf16.gmra.mxu0 %v113
    %v247 = vpop.f32.mrf.mxu0
    %v248 = vadd.f32 0.0, %v247
    %v249 = vpop.f32.mrf.mxu0
    %v250 = vpop.f32.mrf.mxu0
    %v251 = vadd.f32 0.0, %v250
    %v252 = vpop.f32.mrf.mxu0
    %253 = vdwg.mxu0
    %v254 = vadd.f32 %v71, %v248
    %v255 = vadd.f32 %v72, %v251
    %256 = vst [vmem:[#allocation2] sm:$0xff] %v254
    %257 = vst [vmem:[#allocation2 + $0x8] sm:$0xff] %v255
    // Predicated region
    $region18: #{discriminator_forward.7} parent=1 // pred_check
      %p258 = pneg %p65
    $region19: #{discriminator_forward.7} parent=1 // pred_check_branch
      %260 = sbr.rel (%p258) target = $region21
    $region20: #{discriminator_forward.7} parent=1 // pred_region
      %v261 = vld [vmem:[#allocation2] sm:$0xff]
      %v262 = vld [vmem:[#allocation2 + $0x8] sm:$0xff]
      %v263 = vld [vmem:[%s1] sm:$0x1]
      %v265 = vlaneseq
      %v266 = vshrl.u32 %v265, 7
      %v267 = vsub.s32 0, %v266
      %v268 = vrot.slane %v263, %v267
      %v270 = vadd.f32 %v261, %v268
      %v271 = vadd.f32 %v262, %v268
      %vm272 = vcmp.ge.f32.partialorder %v270, 0.0
      %vm273 = vcmp.ge.f32.partialorder %v271, 0.0
      %v274 = vmul.f32 %v270, 0.01
      %v275 = vmul.f32 %v271, 0.01
      %v276 = vsel %vm272, %v270, %v274
      %v277 = vsel %vm273, %v271, %v275
      %v278 = vpack.c.bf16 %v277, %v276
      %v280 = vunpack.c.l.b16 %v278
      %v281 = vunpack.c.h.b16 %v278
      %v282 = vpack.c.b16 %v280, %v280
      %v283 = vpack.c.b16 %v281, %v281
      %286 = vst [vmem:[%s4] sm:$0xf] %v282
      %287 = vst [vmem:[%s4 + $0x4] sm:$0xf] %v283
    $region21: #{discriminator_forward.7} parent=1 // pred_fallthru
      _
    // Predicated region
    $region22: #{discriminator_forward.7} parent=1 // pred_check
      _
    $region23: #{discriminator_forward.7} parent=1 // pred_check_branch
      %289 = sbr.rel (0) target = $region25
    $region24: #{discriminator_forward.7} parent=1 // pred_region
      _
    $region25: #{discriminator_forward.7} parent=1 // pred_fallthru
      _
    // Predicated region
    $region26: #{discriminator_forward.7} parent=1 // pred_check
      _
    $region27: #{discriminator_forward.7} parent=1 // pred_check_branch
      %291 = sbr.rel (0) target = $region29
    $region28: #{discriminator_forward.7} parent=1 // pred_region
      _
    $region29: #{discriminator_forward.7} parent=1 // pred_fallthru
      _

</llo_original>
